<compile_context>
chip_gen: v7x
topology: tpu7x:2x2x1
jax: 0.10.0
libtpu: 0.0.40
codegen_flags: <defaults>
</compile_context>

<pallas_src>
import jax
import jax.numpy as jnp
import numpy as np
from jax.experimental import pallas as pl
from jax.experimental.pallas import tpu as pltpu


def make_divisible(x, divisible_by=8):
    return int(np.ceil(x * 1.0 / divisible_by) * divisible_by)


_SIXTH = 1.0 / 6.0  # multiply by reciprocal instead of f32 divide


def _hswish(v):
    return v * (jnp.clip(v + 3.0, 0.0, 6.0) * _SIXTH)


def _hsigmoid(v):
    return jnp.clip(v + 3.0, 0.0, 6.0) * _SIXTH


def _relu(v):
    return jnp.maximum(v, 0.0)


def _make_kernel(B, H, W, Exp, K, nl, se, use_res):
    pad = (K - 1) // 2
    WE = W * Exp
    BH = B * H
    act = _hswish if nl == "HS" else _relu

    def kernel(x_ref, w1_ref, b1_ref, dw_ref, b2_ref, rmask_ref,
               wse1_ref, bse1_ref, wse2_ref, bse2_ref, w2_ref, b3_ref, o_ref):
        x2d = x_ref[...].astype(jnp.float32)                    # (B*H, W*Cin) lane-dense

        # ---- pconv1 (1x1) + folded BN1 + act: block-diagonal MXU matmul ----------
        h = jnp.dot(x2d.astype(jnp.bfloat16), w1_ref[...],
                    preferred_element_type=jnp.float32)
        h = act(h + b1_ref[...])                                # (B*H, W*Exp)

        # ---- depthwise KxK + folded BN2 + act ------------------------------------
        # dw rows are pre-tiled over W and ALREADY zeroed at W-boundary lanes, so the
        # circular lane shifts below need no in-kernel lane masking.
        dw = dw_ref[...]                                        # (K*K, W*Exp), f32

        # Hoisted lane shifts: one circular shift per dj (2 total for K=3) instead of
        # one per tap.  jnp.roll with a static shift lowers to a single two-slice
        # lane shuffle -- no fresh zeros tensor is materialized.
        lane_sh = {0: h}
        for dj in range(1, pad + 1):
            lane_sh[dj] = jnp.roll(h, -dj * Exp, axis=1)        # reads lane l + dj*Exp
            lane_sh[-dj] = jnp.roll(h, dj * Exp, axis=1)        # reads lane l - dj*Exp

        # Per-tap weights broadcast over rows, so the row (sublane) shift commutes
        # with the weighting: one row shift per di (2 total for K=3) applied to the
        # dj-combined partial sum.  Per-image row-boundary masks (the batch is fused
        # along rows) are precomputed in the wrapper.
        acc = jnp.zeros((BH, WE), jnp.float32)
        for di in range(-pad, pad + 1):
            part = jnp.zeros((BH, WE), jnp.float32)
            for dj in range(-pad, pad + 1):
                t = (di + pad) * K + (dj + pad)
                part = part + lane_sh[dj] * dw[t:t + 1, :]
            if di != 0:
                rm = rmask_ref[:, (di + pad):(di + pad + 1)]    # (B*H, 1) f32
                part = jnp.roll(part, -di, axis=0) * rm
            acc = acc + part
        h2 = act(acc + b2_ref[...])                             # (B*H, W*Exp)

        # ---- squeeze-and-excite (statistics per image) ----------------------------
        if se:
            colsum = jnp.concatenate(
                [jnp.sum(h2[b * H:(b + 1) * H, :], axis=0, keepdims=True)
                 for b in range(B)], axis=0)                    # (B, W*Exp)
            # wse1 is pre-tiled over W and pre-scaled by 1/(H*W): colsum @ wse1_fold
            # equals (global per-image mean) @ fc1.
            s_se = _relu(jnp.dot(colsum.astype(jnp.bfloat16), wse1_ref[...],
                                 preferred_element_type=jnp.float32) + bse1_ref[...])
            gate = _hsigmoid(jnp.dot(s_se.astype(jnp.bfloat16), wse2_ref[...],
                                     preferred_element_type=jnp.float32)
                             + bse2_ref[...])                   # (B, W*Exp)
            h2 = jnp.concatenate(
                [h2[b * H:(b + 1) * H, :] * gate[b:b + 1, :] for b in range(B)],
                axis=0)                                         # (B*H, W*Exp)

        # ---- pconv2 (1x1) + folded BN3 (+ residual) -------------------------------
        out = jnp.dot(h2.astype(jnp.bfloat16), w2_ref[...],
                      preferred_element_type=jnp.float32) + b3_ref[...]  # (B*H, W*Oup)
        if use_res:
            out = out + x2d
        o_ref[...] = out.astype(o_ref.dtype)

    return kernel


def _pack_params(p, H, W, K):
    """Re-pack folded weights into the lane-dense slab layout (pure weight
    preprocessing -- done once, outside the hot path)."""
    Cin, Exp = p["w1"].shape
    pad = (K - 1) // 2
    eye_w = jnp.eye(W, dtype=jnp.float32)
    bf16 = jnp.bfloat16

    # Depthwise taps tiled over W; W-boundary lanes (== lanes that would wrap around
    # under the in-kernel circular lane shift) are zeroed per tap so the kernel does
    # not need any lane masks.
    w_of_lane = jnp.repeat(jnp.arange(W), Exp)                  # (W*Exp,)
    dwf = p["dw"].reshape(K * K, Exp)
    dw_rows = []
    for di_idx in range(K):
        for dj_idx in range(K):
            dj = dj_idx - pad
            valid = ((w_of_lane + dj >= 0) &
                     (w_of_lane + dj <= W - 1)).astype(jnp.float32)
            dw_rows.append(jnp.tile(dwf[di_idx * K + dj_idx], (W,)) * valid)
    dw_packed = jnp.stack(dw_rows, axis=0)                      # (K*K, W*Exp), f32

    return dict(
        w1=jnp.kron(eye_w, p["w1"]).astype(bf16),               # (W*Cin, W*Exp)
        b1=jnp.tile(p["b1"], (1, W)),                           # (1, W*Exp)
        dw=dw_packed,                                           # (K*K, W*Exp)
        b2=jnp.tile(p["b2"], (1, W)),                           # (1, W*Exp)
        wse1=(jnp.tile(p["wse1"], (W, 1)) / float(H * W)).astype(bf16),  # (W*Exp, Red)
        bse1=p["bse1"],                                         # (1, Red)
        wse2=jnp.tile(p["wse2"], (1, W)).astype(bf16),          # (Red, W*Exp)
        bse2=jnp.tile(p["bse2"], (1, W)),                       # (1, W*Exp)
        w2=jnp.kron(eye_w, p["w2"]).astype(bf16),               # (W*Exp, W*Oup)
        b3=jnp.tile(p["b3"], (1, W)),                           # (1, W*Oup)
    )


def mobile_bottleneck_pallas(x, p, *, kernel_size, stride, nl, se, use_res):
    B, H, W, Cin = x.shape
    Exp = p["w1"].shape[1]
    Oup = p["w2"].shape[1]
    K = kernel_size
    pad = (K - 1) // 2
    if stride != 1:
        # TODO(synk): stride > 1 needs lane decimation in the slab layout.
        raise NotImplementedError("Pallas MobileBottleneck kernel supports stride == 1")

    # The kron(I_W, w) block-diagonal 1x1-conv trick is a small-shape specialization:
    # it stores O(W^2 * C * C') weight bytes and wastes W x MXU MACs on structural
    # zeros.  Guard it so large MobileNetV3 layers don't silently blow past VMEM.
    packed_mxu_bytes = 2 * ((W * Cin) * (W * Exp) + (W * Exp) * (W * Oup))  # bf16
    if packed_mxu_bytes > (8 << 20):
        # TODO(synk): add a natural-layout (B*H*W, C) @ (C, C') fallback for large W/C.
        raise NotImplementedError("kron-packed pconv weights too large for VMEM")

    kp = _pack_params(p, H, W, K)
    BH = B * H
    x2 = x.reshape(BH, W * Cin)                                 # lane-dense input slab

    # Row-validity masks for the depthwise row shifts in the batch-fused slab:
    # column (di+pad) is 1.0 where row r can read row r+di inside the SAME image.
    rowpos = np.arange(BH) % H
    rmask = np.stack([((rowpos + di) >= 0) & ((rowpos + di) <= H - 1)
                      for di in range(-pad, pad + 1)], axis=1).astype(np.float32)
    rmask = jnp.asarray(rmask)                                  # (B*H, K)

    kernel = _make_kernel(B, H, W, Exp, K, nl, se, use_res)

    def const_spec(a):
        n = a.ndim
        return pl.BlockSpec(a.shape, lambda i, n=n: (0,) * n)

    Red = kp["wse1"].shape[1]
    flops = (2 * BH * (W * Cin) * (W * Exp)                     # pconv1 (incl. kron zeros)
             + 2 * BH * (W * Exp) * (W * Oup)                   # pconv2
             + 2 * K * K * BH * (W * Exp))                      # depthwise taps
    if se:
        flops += 2 * B * (W * Exp) * Red + 2 * B * Red * (W * Exp)
    bytes_accessed = (int(x2.size) * x2.dtype.itemsize
                      + BH * W * Oup * np.dtype(x.dtype).itemsize
                      + int(rmask.size) * rmask.dtype.itemsize
                      + sum(int(v.size) * v.dtype.itemsize for v in kp.values()))
    cost = pl.CostEstimate(flops=int(flops), transcendentals=0,
                           bytes_accessed=int(bytes_accessed))

    out2 = pl.pallas_call(
        kernel,
        grid=(1,),                                              # whole batch in one step
        in_specs=[
            pl.BlockSpec((BH, W * Cin), lambda i: (0, 0)),
            const_spec(kp["w1"]), const_spec(kp["b1"]),
            const_spec(kp["dw"]), const_spec(kp["b2"]),
            const_spec(rmask),
            const_spec(kp["wse1"]), const_spec(kp["bse1"]),
            const_spec(kp["wse2"]), const_spec(kp["bse2"]),
            const_spec(kp["w2"]), const_spec(kp["b3"]),
        ],
        out_specs=pl.BlockSpec((BH, W * Oup), lambda i: (0, 0)),
        out_shape=jax.ShapeDtypeStruct((BH, W * Oup), x.dtype),
        compiler_params=pltpu.CompilerParams(dimension_semantics=("arbitrary",)),
        cost_estimate=cost,
    )(x2, kp["w1"], kp["b1"], kp["dw"], kp["b2"], rmask,
      kp["wse1"], kp["bse1"], kp["wse2"], kp["bse2"], kp["w2"], kp["b3"])

    return out2.reshape(B, H, W, Oup)


def init_params(key, inp, oup, exp, K, se):
    """Deterministic synthetic weights; BN (eval mode) folded into conv weights.
    MXU-fed weights are rounded to bf16-exact values so the kernel's bf16 operands
    carry no weight-quantization error vs. the f32 reference."""
    red = make_divisible(exp // 4)
    ks = jax.random.split(key, 10)
    eps = 1e-5

    def bn_fold(k, c):
        k1, k2, k3, k4 = jax.random.split(k, 4)
        gamma = 1.0 + 0.1 * jax.random.normal(k1, (c,))
        beta = 0.1 * jax.random.normal(k2, (c,))
        mean = 0.1 * jax.random.normal(k3, (c,))
        var = 0.5 + 0.2 * jnp.abs(jax.random.normal(k4, (c,)))
        scale = gamma / jnp.sqrt(var + eps)
        return scale, beta - mean * scale

    def bf16_exact(w):
        return w.astype(jnp.bfloat16).astype(jnp.float32)

    w1 = 0.3 * jax.random.normal(ks[0], (inp, exp))             # pconv1 (1x1, no bias)
    s1, b1 = bn_fold(ks[1], exp)
    dw = 0.3 * jax.random.normal(ks[2], (K, K, exp))            # depthwise (groups=exp)
    s2, b2 = bn_fold(ks[3], exp)
    wse1 = 0.3 * jax.random.normal(ks[4], (exp, red))           # SE fc1 (1x1 conv, bias)
    bse1 = 0.1 * jax.random.normal(ks[5], (red,))
    wse2 = 0.3 * jax.random.normal(ks[6], (red, exp))           # SE fc2 (1x1 conv, bias)
    bse2 = 0.1 * jax.random.normal(ks[7], (exp,))
    w2 = 0.3 * jax.random.normal(ks[8], (exp, oup))             # pconv2 (1x1, no bias)
    s3, b3 = bn_fold(ks[9], oup)

    f32 = lambda a: a.astype(jnp.float32)
    return dict(
        w1=bf16_exact(f32(w1 * s1[None, :])), b1=f32(b1.reshape(1, exp)),
        dw=f32(dw * s2[None, None, :]), b2=f32(b2.reshape(1, exp)),
        wse1=bf16_exact(f32(wse1)), bse1=f32(bse1.reshape(1, red)),
        wse2=bf16_exact(f32(wse2)), bse2=f32(bse2.reshape(1, exp)),
        w2=bf16_exact(f32(w2 * s3[None, :])), b3=f32(b3.reshape(1, oup)),
    )


def mobile_bottleneck_ref(x, p, *, kernel_size, stride, nl, se, use_res):
    """Pure-JAX f32 reference (same folded params), for correctness checking."""
    act = _hswish if nl == "HS" else _relu
    K = kernel_size
    pad = (K - 1) // 2
    Exp = p["w1"].shape[1]
    h = act(jnp.einsum("bhwc,ce->bhwe", x, p["w1"]) + p["b1"].reshape(1, 1, 1, -1))
    h = jax.lax.conv_general_dilated(
        h, p["dw"].reshape(K, K, 1, Exp), window_strides=(stride, stride),
        padding=((pad, pad), (pad, pad)),
        dimension_numbers=("NHWC", "HWIO", "NHWC"),
        feature_group_count=Exp)
    h = act(h + p["b2"].reshape(1, 1, 1, -1))
    if se:
        xs = h.mean(axis=(1, 2))
        s = _relu(xs @ p["wse1"] + p["bse1"])
        s = _hsigmoid(s @ p["wse2"] + p["bse2"])
        h = h * s[:, None, None, :]
    out = jnp.einsum("bhwe,eo->bhwo", h, p["w2"]) + p["b3"].reshape(1, 1, 1, -1)
    if use_res:
        out = out + x
    return out


if __name__ == "__main__":
    # MobileBottleneck(inp=8, oup=8, kernel=3, stride=1, exp=16, se=True, nl='HS')
    inp, oup, K, stride, exp = 8, 8, 3, 1, 16
    se, nl = True, "HS"
    use_res = (stride == 1 and inp == oup)
    B, H, W = 2, 16, 16

    key = jax.random.PRNGKey(0)
    kx, kp = jax.random.split(key)
    # NHWC input (the PyTorch module's NCHW input [B, inp, H, W], channels-last).
    x = jax.random.normal(kx, (B, H, W, inp), jnp.float32)
    params = init_params(kp, inp, oup, exp, K, se)

    # TODO(synk): BatchNorm is folded with eval-mode (running) statistics;
    # training-mode batch statistics are not computed in-kernel.
    out = mobile_bottleneck_pallas(x, params, kernel_size=K, stride=stride,
                                   nl=nl, se=se, use_res=use_res)
    out = jax.block_until_ready(out)

    ref = mobile_bottleneck_ref(x, params, kernel_size=K, stride=stride,
                                nl=nl, se=se, use_res=use_res)
    assert out.shape == ref.shape
    # bf16 MXU operands (activations) vs f32 reference -> loosened tolerance.
    np.testing.assert_allclose(np.asarray(out), np.asarray(ref), atol=3e-2, rtol=1e-2)
    print("KERNEL_OK")
</pallas_src>

<mosaic_0001>
module attributes {stable_mosaic.version = 11 : i64} {
  func.func @kernel(%arg0: i32, %arg1: memref<32x128xf32, #tpu.memory_space<vmem>>, %arg2: memref<128x256xbf16, #tpu.memory_space<vmem>>, %arg3: memref<1x256xf32, #tpu.memory_space<vmem>>, %arg4: memref<9x256xf32, #tpu.memory_space<vmem>>, %arg5: memref<1x256xf32, #tpu.memory_space<vmem>>, %arg6: memref<32x3xf32, #tpu.memory_space<vmem>>, %arg7: memref<256x8xbf16, #tpu.memory_space<vmem>>, %arg8: memref<1x8xf32, #tpu.memory_space<vmem>>, %arg9: memref<8x256xbf16, #tpu.memory_space<vmem>>, %arg10: memref<1x256xf32, #tpu.memory_space<vmem>>, %arg11: memref<256x128xbf16, #tpu.memory_space<vmem>>, %arg12: memref<1x128xf32, #tpu.memory_space<vmem>>, %arg13: memref<32x128xf32, #tpu.memory_space<vmem>>) attributes {dimension_semantics = [#tpu.dimension_semantics<arbitrary>], iteration_bounds = array<i64: 1>, scalar_prefetch = 0 : i64, scratch_operands = 0 : i64, tpu.core_type = #tpu.core_type<tc>, window_params = [{pipeline_mode = #tpu.pipeline_mode<synchronous>, transform_indices = @transform_0, window_bounds = array<i64: 32, 128>}, {pipeline_mode = #tpu.pipeline_mode<synchronous>, transform_indices = @transform_1, window_bounds = array<i64: 128, 256>}, {pipeline_mode = #tpu.pipeline_mode<synchronous>, transform_indices = @transform_2, window_bounds = array<i64: 1, 256>}, {pipeline_mode = #tpu.pipeline_mode<synchronous>, transform_indices = @transform_3, window_bounds = array<i64: 9, 256>}, {pipeline_mode = #tpu.pipeline_mode<synchronous>, transform_indices = @transform_4, window_bounds = array<i64: 1, 256>}, {pipeline_mode = #tpu.pipeline_mode<synchronous>, transform_indices = @transform_5, window_bounds = array<i64: 32, 3>}, {pipeline_mode = #tpu.pipeline_mode<synchronous>, transform_indices = @transform_6, window_bounds = array<i64: 256, 8>}, {pipeline_mode = #tpu.pipeline_mode<synchronous>, transform_indices = @transform_7, window_bounds = array<i64: 1, 8>}, {pipeline_mode = #tpu.pipeline_mode<synchronous>, transform_indices = @transform_8, window_bounds = array<i64: 8, 256>}, {pipeline_mode = #tpu.pipeline_mode<synchronous>, transform_indices = @transform_9, window_bounds = array<i64: 1, 256>}, {pipeline_mode = #tpu.pipeline_mode<synchronous>, transform_indices = @transform_10, window_bounds = array<i64: 256, 128>}, {pipeline_mode = #tpu.pipeline_mode<synchronous>, transform_indices = @transform_11, window_bounds = array<i64: 1, 128>}, {pipeline_mode = #tpu.pipeline_mode<synchronous>, transform_indices = @transform_12, window_bounds = array<i64: 32, 128>}]} {
    %c0 = arith.constant 0 : index
    %c0_0 = arith.constant 0 : index
    %0 = vector.load %arg1[%c0, %c0_0] : memref<32x128xf32, #tpu.memory_space<vmem>>, vector<32x128xf32>
    %1 = arith.truncf %0 : vector<32x128xf32> to vector<32x128xbf16>
    %c0_1 = arith.constant 0 : index
    %c0_2 = arith.constant 0 : index
    %2 = vector.load %arg2[%c0_1, %c0_2] : memref<128x256xbf16, #tpu.memory_space<vmem>>, vector<128x256xbf16>
    %cst = arith.constant dense<0.000000e+00> : vector<32x256xf32>
    %3 = tpu.matmul %1, %2, %cst {dimension_numbers = #tpu.dot_dimension_numbers<[1], [0], [0], [1], [0, 0, 1, 1], [], []>} : vector<32x128xbf16>, vector<128x256xbf16>, vector<32x256xf32> -> vector<32x256xf32>
    %c0_3 = arith.constant 0 : index
    %c0_4 = arith.constant 0 : index
    %4 = vector.load %arg3[%c0_3, %c0_4] : memref<1x256xf32, #tpu.memory_space<vmem>>, vector<1x256xf32>
    %5 = vector.broadcast %4 : vector<1x256xf32> to vector<32x256xf32>
    %6 = arith.addf %3, %5 : vector<32x256xf32>
    %cst_5 = arith.constant 3.000000e+00 : f32
    %7 = vector.broadcast %cst_5 : f32 to vector<32x256xf32>
    %8 = arith.addf %6, %7 : vector<32x256xf32>
    %cst_6 = arith.constant 0.000000e+00 : f32
    %cst_7 = arith.constant 6.000000e+00 : f32
    %9 = vector.broadcast %cst_6 : f32 to vector<32x256xf32>
    %10 = arith.maximumf %9, %8 : vector<32x256xf32>
    %11 = vector.broadcast %cst_7 : f32 to vector<32x256xf32>
    %12 = arith.minimumf %11, %10 : vector<32x256xf32>
    %cst_8 = arith.constant 0.166666672 : f32
    %13 = vector.broadcast %cst_8 : f32 to vector<32x256xf32>
    %14 = arith.mulf %12, %13 : vector<32x256xf32>
    %15 = arith.mulf %6, %14 : vector<32x256xf32>
    %c0_9 = arith.constant 0 : index
    %c0_10 = arith.constant 0 : index
    %16 = vector.load %arg4[%c0_9, %c0_10] : memref<9x256xf32, #tpu.memory_space<vmem>>, vector<9x256xf32>
    %17 = vector.extract_strided_slice %15 {offsets = [0, 16], sizes = [32, 240], strides = [1, 1]} : vector<32x256xf32> to vector<32x240xf32>
    %18 = vector.extract_strided_slice %15 {offsets = [0, 0], sizes = [32, 16], strides = [1, 1]} : vector<32x256xf32> to vector<32x16xf32>
    %19 = tpu.concatenate %17, %18 in 1 : vector<32x240xf32>, vector<32x16xf32> -> vector<32x256xf32>
    %20 = vector.extract_strided_slice %15 {offsets = [0, 240], sizes = [32, 16], strides = [1, 1]} : vector<32x256xf32> to vector<32x16xf32>
    %21 = vector.extract_strided_slice %15 {offsets = [0, 0], sizes = [32, 240], strides = [1, 1]} : vector<32x256xf32> to vector<32x240xf32>
    %22 = tpu.concatenate %20, %21 in 1 : vector<32x16xf32>, vector<32x240xf32> -> vector<32x256xf32>
    %cst_11 = arith.constant 0.000000e+00 : f32
    %23 = vector.broadcast %cst_11 : f32 to vector<32x256xf32>
    %cst_12 = arith.constant 0.000000e+00 : f32
    %24 = vector.broadcast %cst_12 : f32 to vector<32x256xf32>
    %25 = vector.extract_strided_slice %16 {offsets = [0, 0], sizes = [1, 256], strides = [1, 1]} : vector<9x256xf32> to vector<1x256xf32>
    %26 = vector.broadcast %25 : vector<1x256xf32> to vector<32x256xf32>
    %27 = arith.mulf %22, %26 : vector<32x256xf32>
    %28 = arith.addf %24, %27 : vector<32x256xf32>
    %29 = vector.extract_strided_slice %16 {offsets = [1, 0], sizes = [1, 256], strides = [1, 1]} : vector<9x256xf32> to vector<1x256xf32>
    %30 = vector.broadcast %29 : vector<1x256xf32> to vector<32x256xf32>
    %31 = arith.mulf %15, %30 : vector<32x256xf32>
    %32 = arith.addf %28, %31 : vector<32x256xf32>
    %33 = vector.extract_strided_slice %16 {offsets = [2, 0], sizes = [1, 256], strides = [1, 1]} : vector<9x256xf32> to vector<1x256xf32>
    %34 = vector.broadcast %33 : vector<1x256xf32> to vector<32x256xf32>
    %35 = arith.mulf %19, %34 : vector<32x256xf32>
    %36 = arith.addf %32, %35 : vector<32x256xf32>
    %c0_13 = arith.constant 0 : index
    %c0_14 = arith.constant 0 : index
    %37 = vector.load %arg6[%c0_13, %c0_14] : memref<32x3xf32, #tpu.memory_space<vmem>>, vector<32x1xf32>
    %38 = vector.extract_strided_slice %36 {offsets = [31, 0], sizes = [1, 256], strides = [1, 1]} : vector<32x256xf32> to vector<1x256xf32>
    %39 = vector.extract_strided_slice %36 {offsets = [0, 0], sizes = [31, 256], strides = [1, 1]} : vector<32x256xf32> to vector<31x256xf32>
    %40 = tpu.concatenate %38, %39 in 0 : vector<1x256xf32>, vector<31x256xf32> -> vector<32x256xf32>
    %41 = vector.broadcast %37 : vector<32x1xf32> to vector<32x256xf32>
    %42 = arith.mulf %40, %41 : vector<32x256xf32>
    %43 = arith.addf %23, %42 : vector<32x256xf32>
    %cst_15 = arith.constant 0.000000e+00 : f32
    %44 = vector.broadcast %cst_15 : f32 to vector<32x256xf32>
    %45 = vector.extract_strided_slice %16 {offsets = [3, 0], sizes = [1, 256], strides = [1, 1]} : vector<9x256xf32> to vector<1x256xf32>
    %46 = vector.broadcast %45 : vector<1x256xf32> to vector<32x256xf32>
    %47 = arith.mulf %22, %46 : vector<32x256xf32>
    %48 = arith.addf %44, %47 : vector<32x256xf32>
    %49 = vector.extract_strided_slice %16 {offsets = [4, 0], sizes = [1, 256], strides = [1, 1]} : vector<9x256xf32> to vector<1x256xf32>
    %50 = vector.broadcast %49 : vector<1x256xf32> to vector<32x256xf32>
    %51 = arith.mulf %15, %50 : vector<32x256xf32>
    %52 = arith.addf %48, %51 : vector<32x256xf32>
    %53 = vector.extract_strided_slice %16 {offsets = [5, 0], sizes = [1, 256], strides = [1, 1]} : vector<9x256xf32> to vector<1x256xf32>
    %54 = vector.broadcast %53 : vector<1x256xf32> to vector<32x256xf32>
    %55 = arith.mulf %19, %54 : vector<32x256xf32>
    %56 = arith.addf %52, %55 : vector<32x256xf32>
    %57 = arith.addf %43, %56 : vector<32x256xf32>
    %cst_16 = arith.constant 0.000000e+00 : f32
    %58 = vector.broadcast %cst_16 : f32 to vector<32x256xf32>
    %59 = vector.extract_strided_slice %16 {offsets = [6, 0], sizes = [1, 256], strides = [1, 1]} : vector<9x256xf32> to vector<1x256xf32>
    %60 = vector.broadcast %59 : vector<1x256xf32> to vector<32x256xf32>
    %61 = arith.mulf %22, %60 : vector<32x256xf32>
    %62 = arith.addf %58, %61 : vector<32x256xf32>
    %63 = vector.extract_strided_slice %16 {offsets = [7, 0], sizes = [1, 256], strides = [1, 1]} : vector<9x256xf32> to vector<1x256xf32>
    %64 = vector.broadcast %63 : vector<1x256xf32> to vector<32x256xf32>
    %65 = arith.mulf %15, %64 : vector<32x256xf32>
    %66 = arith.addf %62, %65 : vector<32x256xf32>
    %67 = vector.extract_strided_slice %16 {offsets = [8, 0], sizes = [1, 256], strides = [1, 1]} : vector<9x256xf32> to vector<1x256xf32>
    %68 = vector.broadcast %67 : vector<1x256xf32> to vector<32x256xf32>
    %69 = arith.mulf %19, %68 : vector<32x256xf32>
    %70 = arith.addf %66, %69 : vector<32x256xf32>
    %c0_17 = arith.constant 0 : index
    %c2 = arith.constant 2 : index
    %71 = vector.load %arg6[%c0_17, %c2] : memref<32x3xf32, #tpu.memory_space<vmem>>, vector<32x1xf32>
    %72 = vector.extract_strided_slice %70 {offsets = [1, 0], sizes = [31, 256], strides = [1, 1]} : vector<32x256xf32> to vector<31x256xf32>
    %73 = vector.extract_strided_slice %70 {offsets = [0, 0], sizes = [1, 256], strides = [1, 1]} : vector<32x256xf32> to vector<1x256xf32>
    %74 = tpu.concatenate %72, %73 in 0 : vector<31x256xf32>, vector<1x256xf32> -> vector<32x256xf32>
    %75 = vector.broadcast %71 : vector<32x1xf32> to vector<32x256xf32>
    %76 = arith.mulf %74, %75 : vector<32x256xf32>
    %77 = arith.addf %57, %76 : vector<32x256xf32>
    %c0_18 = arith.constant 0 : index
    %c0_19 = arith.constant 0 : index
    %78 = vector.load %arg5[%c0_18, %c0_19] : memref<1x256xf32, #tpu.memory_space<vmem>>, vector<1x256xf32>
    %79 = vector.broadcast %78 : vector<1x256xf32> to vector<32x256xf32>
    %80 = arith.addf %77, %79 : vector<32x256xf32>
    %cst_20 = arith.constant 3.000000e+00 : f32
    %81 = vector.broadcast %cst_20 : f32 to vector<32x256xf32>
    %82 = arith.addf %80, %81 : vector<32x256xf32>
    %cst_21 = arith.constant 0.000000e+00 : f32
    %cst_22 = arith.constant 6.000000e+00 : f32
    %83 = vector.broadcast %cst_21 : f32 to vector<32x256xf32>
    %84 = arith.maximumf %83, %82 : vector<32x256xf32>
    %85 = vector.broadcast %cst_22 : f32 to vector<32x256xf32>
    %86 = arith.minimumf %85, %84 : vector<32x256xf32>
    %cst_23 = arith.constant 0.166666672 : f32
    %87 = vector.broadcast %cst_23 : f32 to vector<32x256xf32>
    %88 = arith.mulf %86, %87 : vector<32x256xf32>
    %89 = arith.mulf %80, %88 : vector<32x256xf32>
    %90 = vector.extract_strided_slice %89 {offsets = [0, 0], sizes = [16, 256], strides = [1, 1]} : vector<32x256xf32> to vector<16x256xf32>
    %cst_24 = arith.constant dense<0.000000e+00> : vector<256xf32>
    %91 = vector.multi_reduction <add>, %90, %cst_24 [0] : vector<16x256xf32> to vector<256xf32>
    %92 = vector.shape_cast %91 : vector<256xf32> to vector<1x256xf32>
    %93 = vector.extract_strided_slice %89 {offsets = [16, 0], sizes = [16, 256], strides = [1, 1]} : vector<32x256xf32> to vector<16x256xf32>
    %cst_25 = arith.constant dense<0.000000e+00> : vector<256xf32>
    %94 = vector.multi_reduction <add>, %93, %cst_25 [0] : vector<16x256xf32> to vector<256xf32>
    %95 = vector.shape_cast %94 : vector<256xf32> to vector<1x256xf32>
    %96 = tpu.concatenate %92, %95 in 0 : vector<1x256xf32>, vector<1x256xf32> -> vector<2x256xf32>
    %97 = arith.truncf %96 : vector<2x256xf32> to vector<2x256xbf16>
    %c0_26 = arith.constant 0 : index
    %c0_27 = arith.constant 0 : index
    %98 = vector.load %arg7[%c0_26, %c0_27] : memref<256x8xbf16, #tpu.memory_space<vmem>>, vector<256x8xbf16>
    %cst_28 = arith.constant dense<0.000000e+00> : vector<2x8xf32>
    %99 = tpu.matmul %97, %98, %cst_28 {dimension_numbers = #tpu.dot_dimension_numbers<[1], [0], [0], [1], [0, 0, 1, 1], [], []>} : vector<2x256xbf16>, vector<256x8xbf16>, vector<2x8xf32> -> vector<2x8xf32>
    %c0_29 = arith.constant 0 : index
    %c0_30 = arith.constant 0 : index
    %100 = vector.load %arg8[%c0_29, %c0_30] : memref<1x8xf32, #tpu.memory_space<vmem>>, vector<1x8xf32>
    %101 = vector.broadcast %100 : vector<1x8xf32> to vector<2x8xf32>
    %102 = arith.addf %99, %101 : vector<2x8xf32>
    %cst_31 = arith.constant 0.000000e+00 : f32
    %103 = vector.broadcast %cst_31 : f32 to vector<2x8xf32>
    %104 = arith.maximumf %102, %103 : vector<2x8xf32>
    %105 = arith.truncf %104 : vector<2x8xf32> to vector<2x8xbf16>
    %c0_32 = arith.constant 0 : index
    %c0_33 = arith.constant 0 : index
    %106 = vector.load %arg9[%c0_32, %c0_33] : memref<8x256xbf16, #tpu.memory_space<vmem>>, vector<8x256xbf16>
    %cst_34 = arith.constant dense<0.000000e+00> : vector<2x256xf32>
    %107 = tpu.matmul %105, %106, %cst_34 {dimension_numbers = #tpu.dot_dimension_numbers<[1], [0], [0], [1], [0, 0, 1, 1], [], []>} : vector<2x8xbf16>, vector<8x256xbf16>, vector<2x256xf32> -> vector<2x256xf32>
    %c0_35 = arith.constant 0 : index
    %c0_36 = arith.constant 0 : index
    %108 = vector.load %arg10[%c0_35, %c0_36] : memref<1x256xf32, #tpu.memory_space<vmem>>, vector<1x256xf32>
    %109 = vector.broadcast %108 : vector<1x256xf32> to vector<2x256xf32>
    %110 = arith.addf %107, %109 : vector<2x256xf32>
    %cst_37 = arith.constant 3.000000e+00 : f32
    %111 = vector.broadcast %cst_37 : f32 to vector<2x256xf32>
    %112 = arith.addf %110, %111 : vector<2x256xf32>
    %cst_38 = arith.constant 0.000000e+00 : f32
    %cst_39 = arith.constant 6.000000e+00 : f32
    %113 = vector.broadcast %cst_38 : f32 to vector<2x256xf32>
    %114 = arith.maximumf %113, %112 : vector<2x256xf32>
    %115 = vector.broadcast %cst_39 : f32 to vector<2x256xf32>
    %116 = arith.minimumf %115, %114 : vector<2x256xf32>
    %cst_40 = arith.constant 0.166666672 : f32
    %117 = vector.broadcast %cst_40 : f32 to vector<2x256xf32>
    %118 = arith.mulf %116, %117 : vector<2x256xf32>
    %119 = vector.extract_strided_slice %89 {offsets = [0, 0], sizes = [16, 256], strides = [1, 1]} : vector<32x256xf32> to vector<16x256xf32>
    %120 = vector.extract_strided_slice %118 {offsets = [0, 0], sizes = [1, 256], strides = [1, 1]} : vector<2x256xf32> to vector<1x256xf32>
    %121 = vector.broadcast %120 : vector<1x256xf32> to vector<16x256xf32>
    %122 = arith.mulf %119, %121 : vector<16x256xf32>
    %123 = vector.extract_strided_slice %89 {offsets = [16, 0], sizes = [16, 256], strides = [1, 1]} : vector<32x256xf32> to vector<16x256xf32>
    %124 = vector.extract_strided_slice %118 {offsets = [1, 0], sizes = [1, 256], strides = [1, 1]} : vector<2x256xf32> to vector<1x256xf32>
    %125 = vector.broadcast %124 : vector<1x256xf32> to vector<16x256xf32>
    %126 = arith.mulf %123, %125 : vector<16x256xf32>
    %127 = tpu.concatenate %122, %126 in 0 : vector<16x256xf32>, vector<16x256xf32> -> vector<32x256xf32>
    %128 = arith.truncf %127 : vector<32x256xf32> to vector<32x256xbf16>
    %c0_41 = arith.constant 0 : index
    %c0_42 = arith.constant 0 : index
    %129 = vector.load %arg11[%c0_41, %c0_42] : memref<256x128xbf16, #tpu.memory_space<vmem>>, vector<256x128xbf16>
    %cst_43 = arith.constant dense<0.000000e+00> : vector<32x128xf32>
    %130 = tpu.matmul %128, %129, %cst_43 {dimension_numbers = #tpu.dot_dimension_numbers<[1], [0], [0], [1], [0, 0, 1, 1], [], []>} : vector<32x256xbf16>, vector<256x128xbf16>, vector<32x128xf32> -> vector<32x128xf32>
    %c0_44 = arith.constant 0 : index
    %c0_45 = arith.constant 0 : index
    %131 = vector.load %arg12[%c0_44, %c0_45] : memref<1x128xf32, #tpu.memory_space<vmem>>, vector<1x128xf32>
    %132 = vector.broadcast %131 : vector<1x128xf32> to vector<32x128xf32>
    %133 = arith.addf %130, %132 : vector<32x128xf32>
    %134 = arith.addf %133, %0 : vector<32x128xf32>
    %c0_46 = arith.constant 0 : index
    %c0_47 = arith.constant 0 : index
    %135 = vector.load %arg13[%c0_46, %c0_47] : memref<32x128xf32, #tpu.memory_space<vmem>>, vector<32x128xf32>
    tpu.vector_store %arg13[%c0_46, %c0_47], %134 {strides = array<i32>} : memref<32x128xf32, #tpu.memory_space<vmem>>, vector<32x128xf32>,
    return
  }
  func.func @transform_0(%arg0: i32) -> (i32, i32) {
    %c0_i32 = arith.constant 0 : i32
    %c0_i32_0 = arith.constant 0 : i32
    %c0_i32_1 = arith.constant 0 : i32
    return %c0_i32, %c0_i32_0 : i32, i32
  }
  func.func @transform_1(%arg0: i32) -> (i32, i32) {
    %c0_i32 = arith.constant 0 : i32
    %c0_i32_0 = arith.constant 0 : i32
    %c0_i32_1 = arith.constant 0 : i32
    return %c0_i32, %c0_i32_0 : i32, i32
  }
  func.func @transform_2(%arg0: i32) -> (i32, i32) {
    %c0_i32 = arith.constant 0 : i32
    %c0_i32_0 = arith.constant 0 : i32
    %c0_i32_1 = arith.constant 0 : i32
    return %c0_i32, %c0_i32_0 : i32, i32
  }
  func.func @transform_3(%arg0: i32) -> (i32, i32) {
    %c0_i32 = arith.constant 0 : i32
    %c0_i32_0 = arith.constant 0 : i32
    %c0_i32_1 = arith.constant 0 : i32
    return %c0_i32, %c0_i32_0 : i32, i32
  }
  func.func @transform_4(%arg0: i32) -> (i32, i32) {
    %c0_i32 = arith.constant 0 : i32
    %c0_i32_0 = arith.constant 0 : i32
    %c0_i32_1 = arith.constant 0 : i32
    return %c0_i32, %c0_i32_0 : i32, i32
  }
  func.func @transform_5(%arg0: i32) -> (i32, i32) {
    %c0_i32 = arith.constant 0 : i32
    %c0_i32_0 = arith.constant 0 : i32
    %c0_i32_1 = arith.constant 0 : i32
    return %c0_i32, %c0_i32_0 : i32, i32
  }
  func.func @transform_6(%arg0: i32) -> (i32, i32) {
    %c0_i32 = arith.constant 0 : i32
    %c0_i32_0 = arith.constant 0 : i32
    %c0_i32_1 = arith.constant 0 : i32
    return %c0_i32, %c0_i32_0 : i32, i32
  }
  func.func @transform_7(%arg0: i32) -> (i32, i32) {
    %c0_i32 = arith.constant 0 : i32
    %c0_i32_0 = arith.constant 0 : i32
    %c0_i32_1 = arith.constant 0 : i32
    return %c0_i32, %c0_i32_0 : i32, i32
  }
  func.func @transform_8(%arg0: i32) -> (i32, i32) {
    %c0_i32 = arith.constant 0 : i32
    %c0_i32_0 = arith.constant 0 : i32
    %c0_i32_1 = arith.constant 0 : i32
    return %c0_i32, %c0_i32_0 : i32, i32
  }
  func.func @transform_9(%arg0: i32) -> (i32, i32) {
    %c0_i32 = arith.constant 0 : i32
    %c0_i32_0 = arith.constant 0 : i32
    %c0_i32_1 = arith.constant 0 : i32
    return %c0_i32, %c0_i32_0 : i32, i32
  }
  func.func @transform_10(%arg0: i32) -> (i32, i32) {
    %c0_i32 = arith.constant 0 : i32
    %c0_i32_0 = arith.constant 0 : i32
    %c0_i32_1 = arith.constant 0 : i32
    return %c0_i32, %c0_i32_0 : i32, i32
  }
  func.func @transform_11(%arg0: i32) -> (i32, i32) {
    %c0_i32 = arith.constant 0 : i32
    %c0_i32_0 = arith.constant 0 : i32
    %c0_i32_1 = arith.constant 0 : i32
    return %c0_i32, %c0_i32_0 : i32, i32
  }
  func.func @transform_12(%arg0: i32) -> (i32, i32) {
    %c0_i32 = arith.constant 0 : i32
    %c0_i32_0 = arith.constant 0 : i32
    %c0_i32_1 = arith.constant 0 : i32
    return %c0_i32, %c0_i32_0 : i32, i32
  }
}

</mosaic_0001>

<llo_original>
// kernel: tpu_custom_call.1
$region0: #{tpu_custom_call.1}
  #allocation0 [shape = 'u32[]', space=smem, size = 0x4, offset = 0x4, fixed_abs, tag = 'smem constant byte address 0x4 - core index']
  #allocation1 [shape = 'u32[144,128]{1,0:T(1,128)}', space=vmem, size = 0x12000, scoped, tag = 'internal scratch']
  %s0 = inlined_call_operand.vmem [shape: f32[32,128], index: 0, kind: input, shape index: {}]
  %s1 = inlined_call_operand.vmem [shape: bf16[128,256], index: 1, kind: input, shape index: {}]
  %s2 = inlined_call_operand.vmem [shape: f32[1,256], index: 2, kind: input, shape index: {}]
  %s3 = inlined_call_operand.hbm [shape: f32[9,256], index: 3, kind: input, shape index: {}]
  %s4 = inlined_call_operand.vmem [shape: f32[1,256], index: 4, kind: input, shape index: {}]
  %s5 = inlined_call_operand.vmem [shape: f32[32,3], index: 5, kind: input, shape index: {}]
  %s6 = inlined_call_operand.vmem [shape: bf16[256,8], index: 6, kind: input, shape index: {}]
  %s7 = inlined_call_operand.vmem [shape: f32[1,8], index: 7, kind: input, shape index: {}]
  %s8 = inlined_call_operand.vmem [shape: bf16[8,256], index: 8, kind: input, shape index: {}]
  %s9 = inlined_call_operand.vmem [shape: f32[1,256], index: 9, kind: input, shape index: {}]
  %s10 = inlined_call_operand.hbm [shape: bf16[256,128], index: 10, kind: input, shape index: {}]
  %s11 = inlined_call_operand.vmem [shape: f32[1,128], index: 11, kind: input, shape index: {}]
  %s12 = inlined_call_operand.hbm [shape: f32[32,128], index: 12, kind: output, shape index: {}]
  %s13 = sld [smem:[#allocation0]]
  $region66: #{tpu_custom_call.1} parent=0
    _
  %s15 = ssub.s32 1, %s13
  %s16 = scalar_select 0, %s15, %s13
  $region1: #{tpu_custom_call.1} parent=0
    #allocation2 [shape = 'u8[16384]{0}', space=vmem, size = 0x4000, scoped, tag = 'input window, operand 3, single buffered']
    #allocation3 [shape = 's32[1]{0}', space=sflag, size = 0x4, scoped, tag = 'scoped memory for tpu_custom_call.1']
    #allocation4 [shape = 's32[1]{0}', space=sflag, size = 0x4, scoped, tag = 'scoped memory for tpu_custom_call.1']
    #allocation5 [shape = 'u8[65536]{0}', space=vmem, size = 0x10000, scoped, tag = 'input window, operand 10, single buffered']
    #allocation6 [shape = 's32[1]{0}', space=sflag, size = 0x4, scoped, tag = 'scoped memory for tpu_custom_call.1']
    #allocation7 [shape = 'u8[16384]{0}', space=vmem, size = 0x4000, scoped, tag = 'output window, operand 0, single buffered']
    %17 = vsyncpa [#allocation3], 0
    %18 = vsyncpa [#allocation6], 0
    %19 = vsyncpa [#allocation4], 0
    // Predicated region
    $region2: #{tpu_custom_call.1} parent=1 // pred_check
      _
    $region3: #{tpu_custom_call.1} parent=1 // pred_check_branch
      %21 = sbr.rel (0) target = $region5
    $region4: #{tpu_custom_call.1} parent=1 // pred_region
      _
    $region5: #{tpu_custom_call.1} parent=1 // pred_fallthru
      _
    // Predicated region
    $region6: #{tpu_custom_call.1} parent=1 // pred_check
      _
    $region7: #{tpu_custom_call.1} parent=1 // pred_check_branch
      %23 = sbr.rel (0) target = $region9
    $region8: #{tpu_custom_call.1} parent=1 // pred_region
      _
    $region9: #{tpu_custom_call.1} parent=1 // pred_fallthru
      _
    // Predicated region
    $region10: #{tpu_custom_call.1} parent=1 // pred_check
      _
    $region11: #{tpu_custom_call.1} parent=1 // pred_check_branch
      %25 = sbr.rel (0) target = $region13
    $region12: #{tpu_custom_call.1} parent=1 // pred_region
      _
    $region13: #{tpu_custom_call.1} parent=1 // pred_fallthru
      _
    // Predicated region
    $region14: #{tpu_custom_call.1} parent=1 // pred_check
      _
    $region15: #{tpu_custom_call.1} parent=1 // pred_check_branch
      %27 = sbr.rel (0) target = $region17
    $region16: #{tpu_custom_call.1} parent=1 // pred_region
      %s29 = ssub.s32 512, 512
      %30 = vsyncadd [#allocation3], %s29
      %s31 = sshll.u32 [#allocation2], 4
      %s32 = int_to_ptr.vmem [resolvable:$true] %s31
      %37 = dma.hbm_to_vmem [thread:$0]  %s3, 512, %s32, [#allocation3], 256, 256, 16
    $region17: #{tpu_custom_call.1} parent=1 // pred_fallthru
      _
    // Predicated region
    $region18: #{tpu_custom_call.1} parent=1 // pred_check
      _
    $region19: #{tpu_custom_call.1} parent=1 // pred_check_branch
      %39 = sbr.rel (0) target = $region21
    $region20: #{tpu_custom_call.1} parent=1 // pred_region
      _
    $region21: #{tpu_custom_call.1} parent=1 // pred_fallthru
      _
    // Predicated region
    $region22: #{tpu_custom_call.1} parent=1 // pred_check
      _
    $region23: #{tpu_custom_call.1} parent=1 // pred_check_branch
      %41 = sbr.rel (0) target = $region25
    $region24: #{tpu_custom_call.1} parent=1 // pred_region
      _
    $region25: #{tpu_custom_call.1} parent=1 // pred_fallthru
      _
    // Predicated region
    $region26: #{tpu_custom_call.1} parent=1 // pred_check
      _
    $region27: #{tpu_custom_call.1} parent=1 // pred_check_branch
      %43 = sbr.rel (0) target = $region29
    $region28: #{tpu_custom_call.1} parent=1 // pred_region
      _
    $region29: #{tpu_custom_call.1} parent=1 // pred_fallthru
      _
    // Predicated region
    $region30: #{tpu_custom_call.1} parent=1 // pred_check
      _
    $region31: #{tpu_custom_call.1} parent=1 // pred_check_branch
      %45 = sbr.rel (0) target = $region33
    $region32: #{tpu_custom_call.1} parent=1 // pred_region
      _
    $region33: #{tpu_custom_call.1} parent=1 // pred_fallthru
      _
    // Predicated region
    $region34: #{tpu_custom_call.1} parent=1 // pred_check
      _
    $region35: #{tpu_custom_call.1} parent=1 // pred_check_branch
      %47 = sbr.rel (0) target = $region37
    $region36: #{tpu_custom_call.1} parent=1 // pred_region
      _
    $region37: #{tpu_custom_call.1} parent=1 // pred_fallthru
      _
    // Predicated region
    $region38: #{tpu_custom_call.1} parent=1 // pred_check
      _
    $region39: #{tpu_custom_call.1} parent=1 // pred_check_branch
      %49 = sbr.rel (0) target = $region41
    $region40: #{tpu_custom_call.1} parent=1 // pred_region
      _
    $region41: #{tpu_custom_call.1} parent=1 // pred_fallthru
      _
    // Predicated region
    $region42: #{tpu_custom_call.1} parent=1 // pred_check
      _
    $region43: #{tpu_custom_call.1} parent=1 // pred_check_branch
      %51 = sbr.rel (0) target = $region45
    $region44: #{tpu_custom_call.1} parent=1 // pred_region
      %s53 = ssub.s32 2048, 2048
      %54 = vsyncadd [#allocation6], %s53
      %s55 = sshll.u32 [#allocation5], 4
      %s56 = int_to_ptr.vmem [resolvable:$true] %s55
      %61 = dma.hbm_to_vmem [thread:$0]  %s10, 2048, %s56, [#allocation6], 64, 64, 4
    $region45: #{tpu_custom_call.1} parent=1 // pred_fallthru
      _
    // Predicated region
    $region46: #{tpu_custom_call.1} parent=1 // pred_check
      _
    $region47: #{tpu_custom_call.1} parent=1 // pred_check_branch
      %63 = sbr.rel (0) target = $region49
    $region48: #{tpu_custom_call.1} parent=1 // pred_region
      _
    $region49: #{tpu_custom_call.1} parent=1 // pred_fallthru
      _
    // Predicated region
    $region50: #{tpu_custom_call.1} parent=1 // pred_check
      _
    $region51: #{tpu_custom_call.1} parent=1 // pred_check_branch
      %65 = sbr.rel (0) target = $region53
    $region52: #{tpu_custom_call.1} parent=1 // pred_region
      %66 = dma.done [#allocation3], 512
    $region53: #{tpu_custom_call.1} parent=1 // pred_fallthru
      _
    // Predicated region
    $region54: #{tpu_custom_call.1} parent=1 // pred_check
      _
    $region55: #{tpu_custom_call.1} parent=1 // pred_check_branch
      %68 = sbr.rel (0) target = $region57
    $region56: #{tpu_custom_call.1} parent=1 // pred_region
      %69 = dma.done [#allocation6], 2048
    $region57: #{tpu_custom_call.1} parent=1 // pred_fallthru
      _
    %v71 = vld [vmem:[%s0] sm:$0xff]
    %v72 = vld [vmem:[%s0 + $0x8] sm:$0xff]
    %v73 = vld [vmem:[%s0 + $0x10] sm:$0xff]
    %v74 = vld [vmem:[%s0 + $0x18] sm:$0xff]
    %v75 = vpack.c.bf16 %v72, %v71
    %v76 = vpack.c.bf16 %v74, %v73
    %v77 = vld [vmem:[%s1] sm:$0xff]
    %v78 = vld [vmem:[%s1 + $0x8] sm:$0xff]
    %v79 = vld [vmem:[%s1 + $0x10] sm:$0xff]
    %v80 = vld [vmem:[%s1 + $0x18] sm:$0xff]
    %v81 = vld [vmem:[%s1 + $0x20] sm:$0xff]
    %v82 = vld [vmem:[%s1 + $0x28] sm:$0xff]
    %v83 = vld [vmem:[%s1 + $0x30] sm:$0xff]
    %v84 = vld [vmem:[%s1 + $0x38] sm:$0xff]
    %v85 = vld [vmem:[%s1 + $0x40] sm:$0xff]
    %v86 = vld [vmem:[%s1 + $0x48] sm:$0xff]
    %v87 = vld [vmem:[%s1 + $0x50] sm:$0xff]
    %v88 = vld [vmem:[%s1 + $0x58] sm:$0xff]
    %v89 = vld [vmem:[%s1 + $0x60] sm:$0xff]
    %v90 = vld [vmem:[%s1 + $0x68] sm:$0xff]
    %v91 = vld [vmem:[%s1 + $0x70] sm:$0xff]
    %v92 = vld [vmem:[%s1 + $0x78] sm:$0xff]
    %v93 = vld [vmem:[%s2] sm:$0x3]
    %v95 = vlaneseq
    %v96 = vshrl.u32 %v95, 7
    %v97 = vsub.s32 0, %v96
    %v98 = vrot.slane %v93, %v97
    %v99 = vlaneseq
    %v100 = vshrl.u32 %v99, 7
    %v101 = vsub.s32 1, %v100
    %v102 = vrot.slane %v93, %v101
    %v121 = vunpack.c.l.b16 %v77
    %v122 = vunpack.c.h.b16 %v77
    %v123 = vunpack.c.l.b16 %v78
    %v124 = vunpack.c.h.b16 %v78
    %v125 = vunpack.c.l.b16 %v79
    %v126 = vunpack.c.h.b16 %v79
    %v127 = vunpack.c.l.b16 %v80
    %v128 = vunpack.c.h.b16 %v80
    %v129 = vunpack.c.l.b16 %v81
    %v130 = vunpack.c.h.b16 %v81
    %v131 = vunpack.c.l.b16 %v82
    %v132 = vunpack.c.h.b16 %v82
    %v133 = vunpack.c.l.b16 %v83
    %v134 = vunpack.c.h.b16 %v83
    %v135 = vunpack.c.l.b16 %v84
    %v136 = vunpack.c.h.b16 %v84
    %v137 = vunpack.c.l.b16 %v85
    %v138 = vunpack.c.h.b16 %v85
    %v139 = vunpack.c.l.b16 %v86
    %v140 = vunpack.c.h.b16 %v86
    %v141 = vunpack.c.l.b16 %v87
    %v142 = vunpack.c.h.b16 %v87
    %v143 = vunpack.c.l.b16 %v88
    %v144 = vunpack.c.h.b16 %v88
    %v145 = vunpack.c.l.b16 %v89
    %v146 = vunpack.c.h.b16 %v89
    %v147 = vunpack.c.l.b16 %v90
    %v148 = vunpack.c.h.b16 %v90
    %v149 = vunpack.c.l.b16 %v91
    %v150 = vunpack.c.h.b16 %v91
    %v151 = vunpack.c.l.b16 %v92
    %v152 = vunpack.c.h.b16 %v92
    %v153 = vpack.c.b16 %v123, %v121
    %v154 = vpack.c.b16 %v124, %v122
    %v155 = vpack.c.b16 %v127, %v125
    %v156 = vpack.c.b16 %v128, %v126
    %v157 = vpack.c.b16 %v131, %v129
    %v158 = vpack.c.b16 %v132, %v130
    %v159 = vpack.c.b16 %v135, %v133
    %v160 = vpack.c.b16 %v136, %v134
    %v161 = vpack.c.b16 %v139, %v137
    %v162 = vpack.c.b16 %v140, %v138
    %v163 = vpack.c.b16 %v143, %v141
    %v164 = vpack.c.b16 %v144, %v142
    %v165 = vpack.c.b16 %v147, %v145
    %v166 = vpack.c.b16 %v148, %v146
    %v167 = vpack.c.b16 %v151, %v149
    %v168 = vpack.c.b16 %v152, %v150
    %185 = vmatprep.subr.bf16.mxu0 %v154
    %186 = vmatpush1.bf16.msra.mxu0 %v153
    %187 = vmatprep.subr.bf16.mxu0 %v156
    %188 = vmatpush1.bf16.msra.mxu0 %v155
    %189 = vmatprep.subr.bf16.mxu0 %v158
    %190 = vmatpush1.bf16.msra.mxu0 %v157
    %191 = vmatprep.subr.bf16.mxu0 %v160
    %192 = vmatpush1.bf16.msra.mxu0 %v159
    %193 = vmatprep.subr.bf16.mxu0 %v162
    %194 = vmatpush1.bf16.msra.mxu0 %v161
    %195 = vmatprep.subr.bf16.mxu0 %v164
    %196 = vmatpush1.bf16.msra.mxu0 %v163
    %197 = vmatprep.subr.bf16.mxu0 %v166
    %198 = vmatpush1.bf16.msra.mxu0 %v165
    %199 = vmatprep.subr.bf16.mxu0 %v168
    %200 = vmatpush1.bf16.msra.mxu0 %v167
    %201 = vmatprep.subr.bf16.mxu0 0
    %202 = vmatpush1.bf16.msra.mxu0 0
    %203 = vmatprep.subr.bf16.mxu0 0
    %204 = vmatpush1.bf16.msra.mxu0 0
    %205 = vmatprep.subr.bf16.mxu0 0
    %206 = vmatpush1.bf16.msra.mxu0 0
    %207 = vmatprep.subr.bf16.mxu0 0
    %208 = vmatpush1.bf16.msra.mxu0 0
    %209 = vmatprep.subr.bf16.mxu0 0
    %210 = vmatpush1.bf16.msra.mxu0 0
    %211 = vmatprep.subr.bf16.mxu0 0
    %212 = vmatpush1.bf16.msra.mxu0 0
    %213 = vmatprep.subr.bf16.mxu0 0
    %214 = vmatpush1.bf16.msra.mxu0 0
    %215 = vmatprep.subr.bf16.mxu0 0
    %216 = vmatpush1.bf16.msra.mxu0 0
    %217 = vmatprep.mubr.bf16.mxu0 0
    %218 = vmatmul.mubr.bf16.gmra.mrb[0].mxu0 %v75
    %v219 = vpop.f32.mrb[0].mxu0
    %v220 = vadd.f32 %v98, %v219
    %v221 = vpop.f32.mrb[0].mxu0
    %v222 = vadd.f32 %v102, %v221
    %v223 = vpop.f32.mrb[0].mxu0
    %v224 = vadd.f32 %v98, %v223
    %v225 = vpop.f32.mrb[0].mxu0
    %v226 = vadd.f32 %v102, %v225
    %227 = vmatprep.mubr.bf16.mxu0 0
    %228 = vmatmul.mubr.bf16.gmra.mrb[0].mxu0 %v76
    %v229 = vpop.f32.mrb[0].mxu0
    %v230 = vadd.f32 %v98, %v229
    %v231 = vpop.f32.mrb[0].mxu0
    %v232 = vadd.f32 %v102, %v231
    %v233 = vpop.f32.mrb[0].mxu0
    %v234 = vadd.f32 %v98, %v233
    %v235 = vpop.f32.mrb[0].mxu0
    %v236 = vadd.f32 %v102, %v235
    %237 = vdwg.mxu0
    %v238 = vadd.f32 %v220, 3.0
    %v239 = vadd.f32 %v222, 3.0
    %v240 = vadd.f32 %v224, 3.0
    %v241 = vadd.f32 %v226, 3.0
    %v242 = vadd.f32 %v230, 3.0
    %v243 = vadd.f32 %v232, 3.0
    %v244 = vadd.f32 %v234, 3.0
    %v245 = vadd.f32 %v236, 3.0
    %v246 = vmax.f32 %v238, 0.0
    %v247 = vmax.f32 %v239, 0.0
    %v248 = vmax.f32 %v240, 0.0
    %v249 = vmax.f32 %v241, 0.0
    %v250 = vmax.f32 %v242, 0.0
    %v251 = vmax.f32 %v243, 0.0
    %v252 = vmax.f32 %v244, 0.0
    %v253 = vmax.f32 %v245, 0.0
    %v254 = vmin.f32 %v246, 6.0
    %v255 = vmin.f32 %v247, 6.0
    %v256 = vmin.f32 %v248, 6.0
    %v257 = vmin.f32 %v249, 6.0
    %v258 = vmin.f32 %v250, 6.0
    %v259 = vmin.f32 %v251, 6.0
    %v260 = vmin.f32 %v252, 6.0
    %v261 = vmin.f32 %v253, 6.0
    %v262 = vmul.f32 %v254, 0.16666667
    %v263 = vmul.f32 %v255, 0.16666667
    %v264 = vmul.f32 %v256, 0.16666667
    %v265 = vmul.f32 %v257, 0.16666667
    %v266 = vmul.f32 %v258, 0.16666667
    %v267 = vmul.f32 %v259, 0.16666667
    %v268 = vmul.f32 %v260, 0.16666667
    %v269 = vmul.f32 %v261, 0.16666667
    %v270 = vmul.f32 %v220, %v262
    %v271 = vmul.f32 %v222, %v263
    %v272 = vmul.f32 %v224, %v264
    %v273 = vmul.f32 %v226, %v265
    %v274 = vmul.f32 %v230, %v266
    %v275 = vmul.f32 %v232, %v267
    %v276 = vmul.f32 %v234, %v268
    %v277 = vmul.f32 %v236, %v269
    %v278 = vld [vmem:[#allocation2] sm:$0xff]
    %v279 = vld [vmem:[#allocation2 + $0x8] sm:$0xff]
    %v280 = vld [vmem:[#allocation2 + $0x10] sm:$0x1]
    %v281 = vld [vmem:[#allocation2 + $0x18] sm:$0x1]
    %290 = vrot.lane.b32.xlu0 %v270, 112
    %v291 = vpop.permute.xlu0 %290
    %292 = vrot.lane.b32.xlu0 %v271, 112
    %v293 = vpop.permute.xlu0 %292
    %294 = vrot.lane.b32.xlu0 %v272, 112
    %v295 = vpop.permute.xlu0 %294
    %296 = vrot.lane.b32.xlu0 %v273, 112
    %v297 = vpop.permute.xlu0 %296
    %298 = vrot.lane.b32.xlu0 %v274, 112
    %v299 = vpop.permute.xlu0 %298
    %300 = vrot.lane.b32.xlu0 %v275, 112
    %v301 = vpop.permute.xlu0 %300
    %302 = vrot.lane.b32.xlu0 %v276, 112
    %v303 = vpop.permute.xlu0 %302
    %304 = vrot.lane.b32.xlu0 %v277, 112
    %v305 = vpop.permute.xlu0 %304
    %vm306 = vcmask 916480
    %v307 = vsel %vm306, %v291, %v293
    %v308 = vsel %vm306, %v295, %v297
    %v309 = vsel %vm306, %v299, %v301
    %v310 = vsel %vm306, %v303, %v305
    %v323 = vsel %vm306, %v293, %v291
    %v324 = vsel %vm306, %v297, %v295
    %v325 = vsel %vm306, %v301, %v299
    %v326 = vsel %vm306, %v305, %v303
    %327 = vrot.lane.b32.xlu0 %v271, 16
    %v328 = vpop.permute.xlu0 %327
    %329 = vrot.lane.b32.xlu0 %v273, 16
    %v330 = vpop.permute.xlu0 %329
    %331 = vrot.lane.b32.xlu0 %v275, 16
    %v332 = vpop.permute.xlu0 %331
    %333 = vrot.lane.b32.xlu0 %v277, 16
    %v334 = vpop.permute.xlu0 %333
    %339 = vrot.lane.b32.xlu0 %v270, 16
    %v340 = vpop.permute.xlu0 %339
    %341 = vrot.lane.b32.xlu0 %v272, 16
    %v342 = vpop.permute.xlu0 %341
    %343 = vrot.lane.b32.xlu0 %v274, 16
    %v344 = vpop.permute.xlu0 %343
    %345 = vrot.lane.b32.xlu0 %v276, 16
    %v346 = vpop.permute.xlu0 %345
    %vm347 = vcmask 130048
    %v348 = vsel %vm347, %v340, %v328
    %v349 = vsel %vm347, %v342, %v330
    %v350 = vsel %vm347, %v344, %v332
    %v351 = vsel %vm347, %v346, %v334
    %v360 = vsel %vm347, %v328, %v340
    %v361 = vsel %vm347, %v330, %v342
    %v362 = vsel %vm347, %v332, %v344
    %v363 = vsel %vm347, %v334, %v346
    %v364 = vlaneseq
    %v365 = vshrl.u32 %v364, 7
    %v366 = vsub.s32 0, %v365
    %v367 = vrot.slane %v278, %v366
    %v368 = vlaneseq
    %v369 = vshrl.u32 %v368, 7
    %v370 = vsub.s32 0, %v369
    %v371 = vrot.slane %v279, %v370
    %v372 = vmul.f32 %v360, %v367
    %v373 = vmul.f32 %v348, %v371
    %v374 = vmul.f32 %v361, %v367
    %v375 = vmul.f32 %v349, %v371
    %v376 = vmul.f32 %v362, %v367
    %v377 = vmul.f32 %v350, %v371
    %v378 = vmul.f32 %v363, %v367
    %v379 = vmul.f32 %v351, %v371
    %v380 = vadd.f32 %v372, 0.0
    %v381 = vadd.f32 %v373, 0.0
    %v382 = vadd.f32 %v374, 0.0
    %v383 = vadd.f32 %v375, 0.0
    %v384 = vadd.f32 %v376, 0.0
    %v385 = vadd.f32 %v377, 0.0
    %v386 = vadd.f32 %v378, 0.0
    %v387 = vadd.f32 %v379, 0.0
    %v388 = vlaneseq
    %v389 = vshrl.u32 %v388, 7
    %v390 = vsub.s32 1, %v389
    %v391 = vrot.slane %v278, %v390
    %v392 = vlaneseq
    %v393 = vshrl.u32 %v392, 7
    %v394 = vsub.s32 1, %v393
    %v395 = vrot.slane %v279, %v394
    %v396 = vmul.f32 %v270, %v391
    %v397 = vmul.f32 %v271, %v395
    %v398 = vmul.f32 %v272, %v391
    %v399 = vmul.f32 %v273, %v395
    %v400 = vmul.f32 %v274, %v391
    %v401 = vmul.f32 %v275, %v395
    %v402 = vmul.f32 %v276, %v391
    %v403 = vmul.f32 %v277, %v395
    %v404 = vadd.f32 %v380, %v396
    %v405 = vadd.f32 %v381, %v397
    %v406 = vadd.f32 %v382, %v398
    %v407 = vadd.f32 %v383, %v399
    %v408 = vadd.f32 %v384, %v400
    %v409 = vadd.f32 %v385, %v401
    %v410 = vadd.f32 %v386, %v402
    %v411 = vadd.f32 %v387, %v403
    %v412 = vlaneseq
    %v413 = vshrl.u32 %v412, 7
    %v414 = vsub.s32 2, %v413
    %v415 = vrot.slane %v278, %v414
    %v416 = vlaneseq
    %v417 = vshrl.u32 %v416, 7
    %v418 = vsub.s32 2, %v417
    %v419 = vrot.slane %v279, %v418
    %v420 = vmul.f32 %v307, %v415
    %v421 = vmul.f32 %v323, %v419
    %v422 = vmul.f32 %v308, %v415
    %v423 = vmul.f32 %v324, %v419
    %v424 = vmul.f32 %v309, %v415
    %v425 = vmul.f32 %v325, %v419
    %v426 = vmul.f32 %v310, %v415
    %v427 = vmul.f32 %v326, %v419
    %v428 = vadd.f32 %v404, %v420
    %v429 = vadd.f32 %v405, %v421
    %v430 = vadd.f32 %v406, %v422
    %v431 = vadd.f32 %v407, %v423
    %v432 = vadd.f32 %v408, %v424
    %v433 = vadd.f32 %v409, %v425
    %v434 = vadd.f32 %v410, %v426
    %v435 = vadd.f32 %v411, %v427
    %v436 = vld [vmem:[%s5] sm:$0xff]
    %v437 = vld [vmem:[%s5 + $0x8] sm:$0xff]
    %v438 = vld [vmem:[%s5 + $0x10] sm:$0xff]
    %v439 = vld [vmem:[%s5 + $0x18] sm:$0xff]
    %v442 = vrot.slane %v434, 7
    %v443 = vrot.slane %v435, 7
    %vm452 = vcmask 1040384
    %v453 = vrot.slane %v428, 7
    %v454 = vrot.slane %v429, 7
    %v455 = vrot.slane %v430, 7
    %v456 = vsel %vm452, %v453, %v455
    %v457 = vrot.slane %v431, 7
    %v458 = vsel %vm452, %v454, %v457
    %v459 = vrot.slane %v432, 7
    %v460 = vsel %vm452, %v455, %v459
    %v461 = vrot.slane %v433, 7
    %v462 = vsel %vm452, %v457, %v461
    %v463 = vsel %vm452, %v459, %v442
    %v464 = vsel %vm452, %v461, %v443
    %v473 = vsel %vm452, %v442, %v453
    %v474 = vsel %vm452, %v443, %v454
    %476 = vset.pattern.permute.xlu0 0
    %477 = vperm.xlu0 %476, %v436
    %v478 = vpop.permute.xlu0 %477
    %481 = vset.pattern.permute.xlu0 0
    %482 = vperm.xlu0 %481, %v437
    %v483 = vpop.permute.xlu0 %482
    %486 = vset.pattern.permute.xlu0 0
    %487 = vperm.xlu0 %486, %v438
    %v488 = vpop.permute.xlu0 %487
    %491 = vset.pattern.permute.xlu0 0
    %492 = vperm.xlu0 %491, %v439
    %v493 = vpop.permute.xlu0 %492
    %v495 = vmul.f32 %v473, %v478
    %v496 = vmul.f32 %v474, %v478
    %v497 = vmul.f32 %v456, %v483
    %v498 = vmul.f32 %v458, %v483
    %v499 = vmul.f32 %v460, %v488
    %v500 = vmul.f32 %v462, %v488
    %v501 = vmul.f32 %v463, %v493
    %v502 = vmul.f32 %v464, %v493
    %v503 = vadd.f32 %v495, 0.0
    %v504 = vadd.f32 %v496, 0.0
    %v505 = vadd.f32 %v497, 0.0
    %v506 = vadd.f32 %v498, 0.0
    %v507 = vadd.f32 %v499, 0.0
    %v508 = vadd.f32 %v500, 0.0
    %v509 = vadd.f32 %v501, 0.0
    %v510 = vadd.f32 %v502, 0.0
    %v511 = vlaneseq
    %v512 = vshrl.u32 %v511, 7
    %v513 = vsub.s32 3, %v512
    %v514 = vrot.slane %v278, %v513
    %v515 = vlaneseq
    %v516 = vshrl.u32 %v515, 7
    %v517 = vsub.s32 3, %v516
    %v518 = vrot.slane %v279, %v517
    %v519 = vmul.f32 %v360, %v514
    %v520 = vmul.f32 %v348, %v518
    %v521 = vmul.f32 %v361, %v514
    %v522 = vmul.f32 %v349, %v518
    %v523 = vmul.f32 %v362, %v514
    %v524 = vmul.f32 %v350, %v518
    %v525 = vmul.f32 %v363, %v514
    %v526 = vmul.f32 %v351, %v518
    %v527 = vadd.f32 %v519, 0.0
    %v528 = vadd.f32 %v520, 0.0
    %v529 = vadd.f32 %v521, 0.0
    %v530 = vadd.f32 %v522, 0.0
    %v531 = vadd.f32 %v523, 0.0
    %v532 = vadd.f32 %v524, 0.0
    %v533 = vadd.f32 %v525, 0.0
    %v534 = vadd.f32 %v526, 0.0
    %v535 = vlaneseq
    %v536 = vshrl.u32 %v535, 7
    %v537 = vsub.s32 4, %v536
    %v538 = vrot.slane %v278, %v537
    %v539 = vlaneseq
    %v540 = vshrl.u32 %v539, 7
    %v541 = vsub.s32 4, %v540
    %v542 = vrot.slane %v279, %v541
    %v543 = vmul.f32 %v270, %v538
    %v544 = vmul.f32 %v271, %v542
    %v545 = vmul.f32 %v272, %v538
    %v546 = vmul.f32 %v273, %v542
    %v547 = vmul.f32 %v274, %v538
    %v548 = vmul.f32 %v275, %v542
    %v549 = vmul.f32 %v276, %v538
    %v550 = vmul.f32 %v277, %v542
    %v551 = vadd.f32 %v527, %v543
    %v552 = vadd.f32 %v528, %v544
    %v553 = vadd.f32 %v529, %v545
    %v554 = vadd.f32 %v530, %v546
    %v555 = vadd.f32 %v531, %v547
    %v556 = vadd.f32 %v532, %v548
    %v557 = vadd.f32 %v533, %v549
    %v558 = vadd.f32 %v534, %v550
    %v559 = vlaneseq
    %v560 = vshrl.u32 %v559, 7
    %v561 = vsub.s32 5, %v560
    %v562 = vrot.slane %v278, %v561
    %v563 = vlaneseq
    %v564 = vshrl.u32 %v563, 7
    %v565 = vsub.s32 5, %v564
    %v566 = vrot.slane %v279, %v565
    %v567 = vmul.f32 %v307, %v562
    %v568 = vmul.f32 %v323, %v566
    %v569 = vmul.f32 %v308, %v562
    %v570 = vmul.f32 %v324, %v566
    %v571 = vmul.f32 %v309, %v562
    %v572 = vmul.f32 %v325, %v566
    %v573 = vmul.f32 %v310, %v562
    %v574 = vmul.f32 %v326, %v566
    %v575 = vadd.f32 %v551, %v567
    %v576 = vadd.f32 %v552, %v568
    %v577 = vadd.f32 %v553, %v569
    %v578 = vadd.f32 %v554, %v570
    %v579 = vadd.f32 %v555, %v571
    %v580 = vadd.f32 %v556, %v572
    %v581 = vadd.f32 %v557, %v573
    %v582 = vadd.f32 %v558, %v574
    %v583 = vadd.f32 %v503, %v575
    %v584 = vadd.f32 %v504, %v576
    %v585 = vadd.f32 %v505, %v577
    %v586 = vadd.f32 %v506, %v578
    %v587 = vadd.f32 %v507, %v579
    %v588 = vadd.f32 %v508, %v580
    %v589 = vadd.f32 %v509, %v581
    %v590 = vadd.f32 %v510, %v582
    %v591 = vlaneseq
    %v592 = vshrl.u32 %v591, 7
    %v593 = vsub.s32 6, %v592
    %v594 = vrot.slane %v278, %v593
    %v595 = vlaneseq
    %v596 = vshrl.u32 %v595, 7
    %v597 = vsub.s32 6, %v596
    %v598 = vrot.slane %v279, %v597
    %v599 = vmul.f32 %v360, %v594
    %v600 = vmul.f32 %v348, %v598
    %v601 = vmul.f32 %v361, %v594
    %v602 = vmul.f32 %v349, %v598
    %v603 = vmul.f32 %v362, %v594
    %v604 = vmul.f32 %v350, %v598
    %v605 = vmul.f32 %v363, %v594
    %v606 = vmul.f32 %v351, %v598
    %v607 = vadd.f32 %v599, 0.0
    %v608 = vadd.f32 %v600, 0.0
    %v609 = vadd.f32 %v601, 0.0
    %v610 = vadd.f32 %v602, 0.0
    %v611 = vadd.f32 %v603, 0.0
    %v612 = vadd.f32 %v604, 0.0
    %v613 = vadd.f32 %v605, 0.0
    %v614 = vadd.f32 %v606, 0.0
    %v615 = vlaneseq
    %v616 = vshrl.u32 %v615, 7
    %v617 = vsub.s32 7, %v616
    %v618 = vrot.slane %v278, %v617
    %v619 = vlaneseq
    %v620 = vshrl.u32 %v619, 7
    %v621 = vsub.s32 7, %v620
    %v622 = vrot.slane %v279, %v621
    %v623 = vmul.f32 %v270, %v618
    %v624 = vmul.f32 %v271, %v622
    %v625 = vmul.f32 %v272, %v618
    %v626 = vmul.f32 %v273, %v622
    %v627 = vmul.f32 %v274, %v618
    %v628 = vmul.f32 %v275, %v622
    %v629 = vmul.f32 %v276, %v618
    %v630 = vmul.f32 %v277, %v622
    %v631 = vadd.f32 %v607, %v623
    %v632 = vadd.f32 %v608, %v624
    %v633 = vadd.f32 %v609, %v625
    %v634 = vadd.f32 %v610, %v626
    %v635 = vadd.f32 %v611, %v627
    %v636 = vadd.f32 %v612, %v628
    %v637 = vadd.f32 %v613, %v629
    %v638 = vadd.f32 %v614, %v630
    %v639 = vlaneseq
    %v640 = vshrl.u32 %v639, 7
    %v641 = vsub.s32 0, %v640
    %v642 = vrot.slane %v280, %v641
    %v643 = vlaneseq
    %v644 = vshrl.u32 %v643, 7
    %v645 = vsub.s32 0, %v644
    %v646 = vrot.slane %v281, %v645
    %v647 = vmul.f32 %v307, %v642
    %v648 = vmul.f32 %v323, %v646
    %v649 = vmul.f32 %v308, %v642
    %v650 = vmul.f32 %v324, %v646
    %v651 = vmul.f32 %v309, %v642
    %v652 = vmul.f32 %v325, %v646
    %v653 = vmul.f32 %v310, %v642
    %v654 = vmul.f32 %v326, %v646
    %v655 = vadd.f32 %v631, %v647
    %v656 = vadd.f32 %v632, %v648
    %v657 = vadd.f32 %v633, %v649
    %v658 = vadd.f32 %v634, %v650
    %v659 = vadd.f32 %v635, %v651
    %v660 = vadd.f32 %v636, %v652
    %v661 = vadd.f32 %v637, %v653
    %v662 = vadd.f32 %v638, %v654
    %vm671 = vcmask 1046528
    %v672 = vrot.slane %v655, 1
    %v673 = vrot.slane %v657, 1
    %v674 = vsel %vm671, %v672, %v673
    %v675 = vrot.slane %v656, 1
    %v676 = vrot.slane %v658, 1
    %v677 = vsel %vm671, %v675, %v676
    %v678 = vrot.slane %v659, 1
    %v679 = vsel %vm671, %v673, %v678
    %v680 = vrot.slane %v660, 1
    %v681 = vsel %vm671, %v676, %v680
    %v682 = vrot.slane %v661, 1
    %v683 = vsel %vm671, %v678, %v682
    %v684 = vrot.slane %v662, 1
    %v685 = vsel %vm671, %v680, %v684
    %v696 = vsel %vm671, %v682, %v672
    %v697 = vsel %vm671, %v684, %v675
    %698 = vset.pattern.permute.xlu0 2
    %699 = vperm.xlu0 %698, %v436
    %v700 = vpop.permute.xlu0 %699
    %702 = vset.pattern.permute.xlu0 2
    %703 = vperm.xlu0 %702, %v437
    %v704 = vpop.permute.xlu0 %703
    %706 = vset.pattern.permute.xlu0 2
    %707 = vperm.xlu0 %706, %v438
    %v708 = vpop.permute.xlu0 %707
    %710 = vset.pattern.permute.xlu0 2
    %711 = vperm.xlu0 %710, %v439
    %v712 = vpop.permute.xlu0 %711
    %v714 = vmul.f32 %v674, %v700
    %v715 = vmul.f32 %v677, %v700
    %v716 = vmul.f32 %v679, %v704
    %v717 = vmul.f32 %v681, %v704
    %v718 = vmul.f32 %v683, %v708
    %v719 = vmul.f32 %v685, %v708
    %v720 = vmul.f32 %v696, %v712
    %v721 = vmul.f32 %v697, %v712
    %v722 = vadd.f32 %v583, %v714
    %v723 = vadd.f32 %v584, %v715
    %v724 = vadd.f32 %v585, %v716
    %v725 = vadd.f32 %v586, %v717
    %v726 = vadd.f32 %v587, %v718
    %v727 = vadd.f32 %v588, %v719
    %v728 = vadd.f32 %v589, %v720
    %v729 = vadd.f32 %v590, %v721
    %v730 = vld [vmem:[%s4] sm:$0x3]
    %v732 = vlaneseq
    %v733 = vshrl.u32 %v732, 7
    %v734 = vsub.s32 0, %v733
    %v735 = vrot.slane %v730, %v734
    %v736 = vlaneseq
    %v737 = vshrl.u32 %v736, 7
    %v738 = vsub.s32 1, %v737
    %v739 = vrot.slane %v730, %v738
    %v742 = vadd.f32 %v722, %v735
    %v743 = vadd.f32 %v723, %v739
    %v744 = vadd.f32 %v724, %v735
    %v745 = vadd.f32 %v725, %v739
    %v746 = vadd.f32 %v726, %v735
    %v747 = vadd.f32 %v727, %v739
    %v748 = vadd.f32 %v728, %v735
    %v749 = vadd.f32 %v729, %v739
    %v750 = vadd.f32 %v742, 3.0
    %v751 = vadd.f32 %v743, 3.0
    %v752 = vadd.f32 %v744, 3.0
    %v753 = vadd.f32 %v745, 3.0
    %v754 = vadd.f32 %v746, 3.0
    %v755 = vadd.f32 %v747, 3.0
    %v756 = vadd.f32 %v748, 3.0
    %v757 = vadd.f32 %v749, 3.0
    %v758 = vmax.f32 %v750, 0.0
    %v759 = vmax.f32 %v751, 0.0
    %v760 = vmax.f32 %v752, 0.0
    %v761 = vmax.f32 %v753, 0.0
    %v762 = vmax.f32 %v754, 0.0
    %v763 = vmax.f32 %v755, 0.0
    %v764 = vmax.f32 %v756, 0.0
    %v765 = vmax.f32 %v757, 0.0
    %v766 = vmin.f32 %v758, 6.0
    %v767 = vmin.f32 %v759, 6.0
    %v768 = vmin.f32 %v760, 6.0
    %v769 = vmin.f32 %v761, 6.0
    %v770 = vmin.f32 %v762, 6.0
    %v771 = vmin.f32 %v763, 6.0
    %v772 = vmin.f32 %v764, 6.0
    %v773 = vmin.f32 %v765, 6.0
    %v774 = vmul.f32 %v766, 0.16666667
    %v775 = vmul.f32 %v767, 0.16666667
    %v776 = vmul.f32 %v768, 0.16666667
    %v777 = vmul.f32 %v769, 0.16666667
    %v778 = vmul.f32 %v770, 0.16666667
    %v779 = vmul.f32 %v771, 0.16666667
    %v780 = vmul.f32 %v772, 0.16666667
    %v781 = vmul.f32 %v773, 0.16666667
    %v782 = vmul.f32 %v742, %v774
    %v783 = vmul.f32 %v743, %v775
    %v784 = vmul.f32 %v744, %v776
    %v785 = vmul.f32 %v745, %v777
    %v786 = vmul.f32 %v746, %v778
    %v787 = vmul.f32 %v747, %v779
    %v788 = vmul.f32 %v748, %v780
    %v789 = vmul.f32 %v749, %v781
    %v790 = vadd.f32 %v782, %v784
    %v791 = vrot.slane %v790, 4
    %v792 = vadd.f32 %v790, %v791
    %v793 = vrot.slane %v792, 2
    %v794 = vadd.f32 %v792, %v793
    %v795 = vrot.slane %v794, 1
    %v796 = vadd.f32 %v794, %v795
    %v797 = vadd.f32 %v783, %v785
    %v798 = vrot.slane %v797, 4
    %v799 = vadd.f32 %v797, %v798
    %v800 = vrot.slane %v799, 2
    %v801 = vadd.f32 %v799, %v800
    %v802 = vrot.slane %v801, 1
    %v803 = vadd.f32 %v801, %v802
    %v804 = vadd.f32 %v786, %v788
    %v805 = vrot.slane %v804, 4
    %v806 = vadd.f32 %v804, %v805
    %v807 = vrot.slane %v806, 2
    %v808 = vadd.f32 %v806, %v807
    %v809 = vrot.slane %v808, 1
    %v810 = vadd.f32 %v808, %v809
    %v811 = vadd.f32 %v787, %v789
    %v812 = vrot.slane %v811, 4
    %v813 = vadd.f32 %v811, %v812
    %v814 = vrot.slane %v813, 2
    %v815 = vadd.f32 %v813, %v814
    %v816 = vrot.slane %v815, 1
    %v817 = vadd.f32 %v815, %v816
    %v818 = vsel %vm452, %v796, %v810
    %v819 = vsel %vm452, %v803, %v817
    %v820 = vpack.c.bf16 %v818, %v818
    %v821 = vpack.c.bf16 %v819, %v819
    %v822 = vld [vmem:[%s6] sm:$0xf]
    %v823 = vld [vmem:[%s6 + $0x4] sm:$0xf]
    %v824 = vld [vmem:[%s6 + $0x8] sm:$0xf]
    %v825 = vld [vmem:[%s6 + $0xc] sm:$0xf]
    %v826 = vld [vmem:[%s6 + $0x10] sm:$0xf]
    %v827 = vld [vmem:[%s6 + $0x14] sm:$0xf]
    %v828 = vld [vmem:[%s6 + $0x18] sm:$0xf]
    %v829 = vld [vmem:[%s6 + $0x1c] sm:$0xf]
    %v830 = vld [vmem:[%s6 + $0x20] sm:$0xf]
    %v831 = vld [vmem:[%s6 + $0x24] sm:$0xf]
    %v832 = vld [vmem:[%s6 + $0x28] sm:$0xf]
    %v833 = vld [vmem:[%s6 + $0x2c] sm:$0xf]
    %v834 = vld [vmem:[%s6 + $0x30] sm:$0xf]
    %v835 = vld [vmem:[%s6 + $0x34] sm:$0xf]
    %v836 = vld [vmem:[%s6 + $0x38] sm:$0xf]
    %v837 = vld [vmem:[%s6 + $0x3c] sm:$0xf]
    %v838 = vld [vmem:[%s6 + $0x40] sm:$0xf]
    %v839 = vld [vmem:[%s6 + $0x44] sm:$0xf]
    %v840 = vld [vmem:[%s6 + $0x48] sm:$0xf]
    %v841 = vld [vmem:[%s6 + $0x4c] sm:$0xf]
    %v842 = vld [vmem:[%s6 + $0x50] sm:$0xf]
    %v843 = vld [vmem:[%s6 + $0x54] sm:$0xf]
    %v844 = vld [vmem:[%s6 + $0x58] sm:$0xf]
    %v845 = vld [vmem:[%s6 + $0x5c] sm:$0xf]
    %v846 = vld [vmem:[%s6 + $0x60] sm:$0xf]
    %v847 = vld [vmem:[%s6 + $0x64] sm:$0xf]
    %v848 = vld [vmem:[%s6 + $0x68] sm:$0xf]
    %v849 = vld [vmem:[%s6 + $0x6c] sm:$0xf]
    %v850 = vld [vmem:[%s6 + $0x70] sm:$0xf]
    %v851 = vld [vmem:[%s6 + $0x74] sm:$0xf]
    %v852 = vld [vmem:[%s6 + $0x78] sm:$0xf]
    %v853 = vld [vmem:[%s6 + $0x7c] sm:$0xf]
    %v854 = vld [vmem:[%s7] sm:$0x1]
    %v856 = vlaneseq
    %v857 = vshrl.u32 %v856, 7
    %v858 = vsub.s32 0, %v857
    %v859 = vrot.slane %v854, %v858
    %v893 = vunpack.c.l.b16 %v822
    %v894 = vunpack.c.l.b16 %v823
    %v895 = vunpack.c.l.b16 %v824
    %v896 = vunpack.c.l.b16 %v825
    %v897 = vunpack.c.l.b16 %v826
    %v898 = vunpack.c.l.b16 %v827
    %v899 = vunpack.c.l.b16 %v828
    %v900 = vunpack.c.l.b16 %v829
    %v901 = vunpack.c.l.b16 %v830
    %v902 = vunpack.c.l.b16 %v831
    %v903 = vunpack.c.l.b16 %v832
    %v904 = vunpack.c.l.b16 %v833
    %v905 = vunpack.c.l.b16 %v834
    %v906 = vunpack.c.l.b16 %v835
    %v907 = vunpack.c.l.b16 %v836
    %v908 = vunpack.c.l.b16 %v837
    %v909 = vunpack.c.l.b16 %v838
    %v910 = vunpack.c.l.b16 %v839
    %v911 = vunpack.c.l.b16 %v840
    %v912 = vunpack.c.l.b16 %v841
    %v913 = vunpack.c.l.b16 %v842
    %v914 = vunpack.c.l.b16 %v843
    %v915 = vunpack.c.l.b16 %v844
    %v916 = vunpack.c.l.b16 %v845
    %v917 = vunpack.c.l.b16 %v846
    %v918 = vunpack.c.l.b16 %v847
    %v919 = vunpack.c.l.b16 %v848
    %v920 = vunpack.c.l.b16 %v849
    %v921 = vunpack.c.l.b16 %v850
    %v922 = vunpack.c.l.b16 %v851
    %v923 = vunpack.c.l.b16 %v852
    %v924 = vunpack.c.l.b16 %v853
    %v925 = vpack.c.b16 %v894, %v893
    %v926 = vpack.c.b16 %v896, %v895
    %v927 = vpack.c.b16 %v898, %v897
    %v928 = vpack.c.b16 %v900, %v899
    %v929 = vpack.c.b16 %v902, %v901
    %v930 = vpack.c.b16 %v904, %v903
    %v931 = vpack.c.b16 %v906, %v905
    %v932 = vpack.c.b16 %v908, %v907
    %v933 = vpack.c.b16 %v910, %v909
    %v934 = vpack.c.b16 %v912, %v911
    %v935 = vpack.c.b16 %v914, %v913
    %v936 = vpack.c.b16 %v916, %v915
    %v937 = vpack.c.b16 %v918, %v917
    %v938 = vpack.c.b16 %v920, %v919
    %v939 = vpack.c.b16 %v922, %v921
    %v940 = vpack.c.b16 %v924, %v923
    %957 = vmatprep.subr.bf16.mxu0 0
    %958 = vmatpush1.bf16.msra.mxu0 %v925
    %959 = vmatprep.subr.bf16.mxu0 0
    %960 = vmatpush1.bf16.msra.mxu0 %v926
    %961 = vmatprep.subr.bf16.mxu0 0
    %962 = vmatpush1.bf16.msra.mxu0 %v927
    %963 = vmatprep.subr.bf16.mxu0 0
    %964 = vmatpush1.bf16.msra.mxu0 %v928
    %965 = vmatprep.subr.bf16.mxu0 0
    %966 = vmatpush1.bf16.msra.mxu0 %v929
    %967 = vmatprep.subr.bf16.mxu0 0
    %968 = vmatpush1.bf16.msra.mxu0 %v930
    %969 = vmatprep.subr.bf16.mxu0 0
    %970 = vmatpush1.bf16.msra.mxu0 %v931
    %971 = vmatprep.subr.bf16.mxu0 0
    %972 = vmatpush1.bf16.msra.mxu0 %v932
    %973 = vmatprep.subr.bf16.mxu0 0
    %974 = vmatpush1.bf16.msra.mxu0 %v933
    %975 = vmatprep.subr.bf16.mxu0 0
    %976 = vmatpush1.bf16.msra.mxu0 %v934
    %977 = vmatprep.subr.bf16.mxu0 0
    %978 = vmatpush1.bf16.msra.mxu0 %v935
    %979 = vmatprep.subr.bf16.mxu0 0
    %980 = vmatpush1.bf16.msra.mxu0 %v936
    %981 = vmatprep.subr.bf16.mxu0 0
    %982 = vmatpush1.bf16.msra.mxu0 %v937
    %983 = vmatprep.subr.bf16.mxu0 0
    %984 = vmatpush1.bf16.msra.mxu0 %v938
    %985 = vmatprep.subr.bf16.mxu0 0
    %986 = vmatpush1.bf16.msra.mxu0 %v939
    %987 = vmatprep.subr.bf16.mxu0 0
    %988 = vmatpush1.bf16.msra.mxu0 %v940
    %989 = vmatprep.mubr.bf16.mxu0 %v821
    %990 = vmatmul.mubr.bf16.gmra.mrb[0].mxu0 %v820
    %v991 = vpop.f32.mrb[0].mxu0
    %v992 = vadd.f32 %v859, %v991
    %v993 = vpop.f32.mrb[0].mxu0
    %v994 = vpop.f32.mrb[0].mxu0
    %v995 = vpop.f32.mrb[0].mxu0
    %996 = vdwg.mxu0
    %v997 = vmax.f32 %v992, 0.0
    %v998 = vpack.c.bf16 %v997, %v997
    %v999 = vld [vmem:[%s8] sm:$0xff]
    %v1000 = vld [vmem:[%s9] sm:$0x3]
    %v1002 = vlaneseq
    %v1003 = vshrl.u32 %v1002, 7
    %v1004 = vsub.s32 0, %v1003
    %v1005 = vrot.slane %v1000, %v1004
    %v1006 = vlaneseq
    %v1007 = vshrl.u32 %v1006, 7
    %v1008 = vsub.s32 1, %v1007
    %v1009 = vrot.slane %v1000, %v1008
    %v1013 = vunpack.c.l.b16 %v999
    %v1014 = vunpack.c.h.b16 %v999
    %v1015 = vpack.c.b16 %v1013, %v1013
    %v1016 = vpack.c.b16 %v1014, %v1014
    %vm1017 = vcmask 64512
    %v1019 = vsel %vm1017, %v998, 0
    %vm1021 = vcmask 1043456
    %v1023 = vsel %vm1021, %v1015, 0
    %v1026 = vsel %vm1021, %v1016, 0
    %1028 = vmatprep.subr.bf16.mxu0 %v1026
    %1029 = vmatpush1.bf16.msra.mxu0 %v1023
    %1030 = vmatprep.subr.bf16.mxu0 0
    %1031 = vmatpush1.bf16.msra.mxu0 0
    %1032 = vmatprep.subr.bf16.mxu0 0
    %1033 = vmatpush1.bf16.msra.mxu0 0
    %1034 = vmatprep.subr.bf16.mxu0 0
    %1035 = vmatpush1.bf16.msra.mxu0 0
    %1036 = vmatprep.subr.bf16.mxu0 0
    %1037 = vmatpush1.bf16.msra.mxu0 0
    %1038 = vmatprep.subr.bf16.mxu0 0
    %1039 = vmatpush1.bf16.msra.mxu0 0
    %1040 = vmatprep.subr.bf16.mxu0 0
    %1041 = vmatpush1.bf16.msra.mxu0 0
    %1042 = vmatprep.subr.bf16.mxu0 0
    %1043 = vmatpush1.bf16.msra.mxu0 0
    %1044 = vmatprep.subr.bf16.mxu0 0
    %1045 = vmatpush1.bf16.msra.mxu0 0
    %1046 = vmatprep.subr.bf16.mxu0 0
    %1047 = vmatpush1.bf16.msra.mxu0 0
    %1048 = vmatprep.subr.bf16.mxu0 0
    %1049 = vmatpush1.bf16.msra.mxu0 0
    %1050 = vmatprep.subr.bf16.mxu0 0
    %1051 = vmatpush1.bf16.msra.mxu0 0
    %1052 = vmatprep.subr.bf16.mxu0 0
    %1053 = vmatpush1.bf16.msra.mxu0 0
    %1054 = vmatprep.subr.bf16.mxu0 0
    %1055 = vmatpush1.bf16.msra.mxu0 0
    %1056 = vmatprep.subr.bf16.mxu0 0
    %1057 = vmatpush1.bf16.msra.mxu0 0
    %1058 = vmatprep.subr.bf16.mxu0 0
    %1059 = vmatpush1.bf16.msra.mxu0 0
    %1060 = vmatprep.mubr.bf16.mxu0 0
    %1061 = vmatmul.mubr.bf16.gmra.mrb[0].mxu0 %v1019
    %v1062 = vpop.f32.mrb[0].mxu0
    %v1063 = vadd.f32 %v1005, %v1062
    %v1064 = vpop.f32.mrb[0].mxu0
    %v1065 = vadd.f32 %v1009, %v1064
    %v1066 = vpop.f32.mrb[0].mxu0
    %v1067 = vpop.f32.mrb[0].mxu0
    %1068 = vdwg.mxu0
    %v1069 = vadd.f32 %v1063, 3.0
    %v1070 = vadd.f32 %v1065, 3.0
    %v1071 = vmax.f32 %v1069, 0.0
    %v1072 = vmax.f32 %v1070, 0.0
    %v1073 = vmin.f32 %v1071, 6.0
    %v1074 = vmin.f32 %v1072, 6.0
    %v1075 = vmul.f32 %v1073, 0.16666667
    %v1076 = vmul.f32 %v1074, 0.16666667
    %v1077 = vlaneseq
    %v1078 = vshrl.u32 %v1077, 7
    %v1079 = vsub.s32 0, %v1078
    %v1080 = vrot.slane %v1075, %v1079
    %v1081 = vlaneseq
    %v1082 = vshrl.u32 %v1081, 7
    %v1083 = vsub.s32 0, %v1082
    %v1084 = vrot.slane %v1076, %v1083
    %v1085 = vmul.f32 %v782, %v1080
    %v1086 = vmul.f32 %v783, %v1084
    %v1087 = vmul.f32 %v784, %v1080
    %v1088 = vmul.f32 %v785, %v1084
    %v1089 = vlaneseq
    %v1090 = vshrl.u32 %v1089, 7
    %v1091 = vsub.s32 1, %v1090
    %v1092 = vrot.slane %v1075, %v1091
    %v1093 = vlaneseq
    %v1094 = vshrl.u32 %v1093, 7
    %v1095 = vsub.s32 1, %v1094
    %v1096 = vrot.slane %v1076, %v1095
    %v1097 = vmul.f32 %v786, %v1092
    %v1098 = vmul.f32 %v787, %v1096
    %v1099 = vmul.f32 %v788, %v1092
    %v1100 = vmul.f32 %v789, %v1096
    %v1101 = vpack.c.bf16 %v1087, %v1085
    %v1102 = vpack.c.bf16 %v1088, %v1086
    %v1103 = vpack.c.bf16 %v1099, %v1097
    %v1104 = vpack.c.bf16 %v1100, %v1098
    %v1105 = vld [vmem:[#allocation5] sm:$0xf]
    %v1106 = vld [vmem:[#allocation5 + $0x4] sm:$0xf]
    %v1107 = vld [vmem:[#allocation5 + $0x8] sm:$0xf]
    %v1108 = vld [vmem:[#allocation5 + $0xc] sm:$0xf]
    %v1109 = vld [vmem:[#allocation5 + $0x10] sm:$0xf]
    %v1110 = vld [vmem:[#allocation5 + $0x14] sm:$0xf]
    %v1111 = vld [vmem:[#allocation5 + $0x18] sm:$0xf]
    %v1112 = vld [vmem:[#allocation5 + $0x1c] sm:$0xf]
    %v1113 = vld [vmem:[#allocation5 + $0x20] sm:$0xf]
    %v1114 = vld [vmem:[#allocation5 + $0x24] sm:$0xf]
    %v1115 = vld [vmem:[#allocation5 + $0x28] sm:$0xf]
    %v1116 = vld [vmem:[#allocation5 + $0x2c] sm:$0xf]
    %v1117 = vld [vmem:[#allocation5 + $0x30] sm:$0xf]
    %v1118 = vld [vmem:[#allocation5 + $0x34] sm:$0xf]
    %v1119 = vld [vmem:[#allocation5 + $0x38] sm:$0xf]
    %v1120 = vld [vmem:[#allocation5 + $0x3c] sm:$0xf]
    %v1121 = vld [vmem:[#allocation5 + $0x40] sm:$0xf]
    %v1122 = vld [vmem:[#allocation5 + $0x44] sm:$0xf]
    %v1123 = vld [vmem:[#allocation5 + $0x48] sm:$0xf]
    %v1124 = vld [vmem:[#allocation5 + $0x4c] sm:$0xf]
    %v1125 = vld [vmem:[#allocation5 + $0x50] sm:$0xf]
    %v1126 = vld [vmem:[#allocation5 + $0x54] sm:$0xf]
    %v1127 = vld [vmem:[#allocation5 + $0x58] sm:$0xf]
    %v1128 = vld [vmem:[#allocation5 + $0x5c] sm:$0xf]
    %v1129 = vld [vmem:[#allocation5 + $0x60] sm:$0xf]
    %v1130 = vld [vmem:[#allocation5 + $0x64] sm:$0xf]
    %v1131 = vld [vmem:[#allocation5 + $0x68] sm:$0xf]
    %v1132 = vld [vmem:[#allocation5 + $0x6c] sm:$0xf]
    %v1133 = vld [vmem:[#allocation5 + $0x70] sm:$0xf]
    %v1134 = vld [vmem:[#allocation5 + $0x74] sm:$0xf]
    %v1135 = vld [vmem:[#allocation5 + $0x78] sm:$0xf]
    %v1136 = vld [vmem:[#allocation5 + $0x7c] sm:$0xf]
    %v1137 = vld [vmem:[%s11] sm:$0x1]
    %v1139 = vlaneseq
    %v1140 = vshrl.u32 %v1139, 7
    %v1141 = vsub.s32 0, %v1140
    %v1142 = vrot.slane %v1137, %v1141
    %v1176 = vunpack.c.l.b16 %v1105
    %v1177 = vunpack.c.l.b16 %v1106
    %v1178 = vunpack.c.l.b16 %v1107
    %v1179 = vunpack.c.l.b16 %v1108
    %v1180 = vunpack.c.l.b16 %v1109
    %v1181 = vunpack.c.l.b16 %v1110
    %v1182 = vunpack.c.l.b16 %v1111
    %v1183 = vunpack.c.l.b16 %v1112
    %v1184 = vunpack.c.l.b16 %v1113
    %v1185 = vunpack.c.l.b16 %v1114
    %v1186 = vunpack.c.l.b16 %v1115
    %v1187 = vunpack.c.l.b16 %v1116
    %v1188 = vunpack.c.l.b16 %v1117
    %v1189 = vunpack.c.l.b16 %v1118
    %v1190 = vunpack.c.l.b16 %v1119
    %v1191 = vunpack.c.l.b16 %v1120
    %v1192 = vunpack.c.l.b16 %v1121
    %v1193 = vunpack.c.l.b16 %v1122
    %v1194 = vunpack.c.l.b16 %v1123
    %v1195 = vunpack.c.l.b16 %v1124
    %v1196 = vunpack.c.l.b16 %v1125
    %v1197 = vunpack.c.l.b16 %v1126
    %v1198 = vunpack.c.l.b16 %v1127
    %v1199 = vunpack.c.l.b16 %v1128
    %v1200 = vunpack.c.l.b16 %v1129
    %v1201 = vunpack.c.l.b16 %v1130
    %v1202 = vunpack.c.l.b16 %v1131
    %v1203 = vunpack.c.l.b16 %v1132
    %v1204 = vunpack.c.l.b16 %v1133
    %v1205 = vunpack.c.l.b16 %v1134
    %v1206 = vunpack.c.l.b16 %v1135
    %v1207 = vunpack.c.l.b16 %v1136
    %v1208 = vpack.c.b16 %v1177, %v1176
    %v1209 = vpack.c.b16 %v1179, %v1178
    %v1210 = vpack.c.b16 %v1181, %v1180
    %v1211 = vpack.c.b16 %v1183, %v1182
    %v1212 = vpack.c.b16 %v1185, %v1184
    %v1213 = vpack.c.b16 %v1187, %v1186
    %v1214 = vpack.c.b16 %v1189, %v1188
    %v1215 = vpack.c.b16 %v1191, %v1190
    %v1216 = vpack.c.b16 %v1193, %v1192
    %v1217 = vpack.c.b16 %v1195, %v1194
    %v1218 = vpack.c.b16 %v1197, %v1196
    %v1219 = vpack.c.b16 %v1199, %v1198
    %v1220 = vpack.c.b16 %v1201, %v1200
    %v1221 = vpack.c.b16 %v1203, %v1202
    %v1222 = vpack.c.b16 %v1205, %v1204
    %v1223 = vpack.c.b16 %v1207, %v1206
    %1240 = vmatprep.subr.bf16.mxu0 0
    %1241 = vmatpush1.bf16.msra.mxu0 %v1208
    %1242 = vmatprep.subr.bf16.mxu0 0
    %1243 = vmatpush1.bf16.msra.mxu0 %v1209
    %1244 = vmatprep.subr.bf16.mxu0 0
    %1245 = vmatpush1.bf16.msra.mxu0 %v1210
    %1246 = vmatprep.subr.bf16.mxu0 0
    %1247 = vmatpush1.bf16.msra.mxu0 %v1211
    %1248 = vmatprep.subr.bf16.mxu0 0
    %1249 = vmatpush1.bf16.msra.mxu0 %v1212
    %1250 = vmatprep.subr.bf16.mxu0 0
    %1251 = vmatpush1.bf16.msra.mxu0 %v1213
    %1252 = vmatprep.subr.bf16.mxu0 0
    %1253 = vmatpush1.bf16.msra.mxu0 %v1214
    %1254 = vmatprep.subr.bf16.mxu0 0
    %1255 = vmatpush1.bf16.msra.mxu0 %v1215
    %1256 = vmatprep.subr.bf16.mxu0 0
    %1257 = vmatpush1.bf16.msra.mxu0 %v1216
    %1258 = vmatprep.subr.bf16.mxu0 0
    %1259 = vmatpush1.bf16.msra.mxu0 %v1217
    %1260 = vmatprep.subr.bf16.mxu0 0
    %1261 = vmatpush1.bf16.msra.mxu0 %v1218
    %1262 = vmatprep.subr.bf16.mxu0 0
    %1263 = vmatpush1.bf16.msra.mxu0 %v1219
    %1264 = vmatprep.subr.bf16.mxu0 0
    %1265 = vmatpush1.bf16.msra.mxu0 %v1220
    %1266 = vmatprep.subr.bf16.mxu0 0
    %1267 = vmatpush1.bf16.msra.mxu0 %v1221
    %1268 = vmatprep.subr.bf16.mxu0 0
    %1269 = vmatpush1.bf16.msra.mxu0 %v1222
    %1270 = vmatprep.subr.bf16.mxu0 0
    %1271 = vmatpush1.bf16.msra.mxu0 %v1223
    %1272 = vmatprep.mubr.bf16.mxu0 %v1102
    %1273 = vmatmul.mubr.bf16.gmra.mrb[0].mxu0 %v1101
    %v1274 = vpop.f32.mrb[0].mxu0
    %v1275 = vadd.f32 %v1142, %v1274
    %v1276 = vpop.f32.mrb[0].mxu0
    %v1277 = vpop.f32.mrb[0].mxu0
    %v1278 = vadd.f32 %v1142, %v1277
    %v1279 = vpop.f32.mrb[0].mxu0
    %1280 = vmatprep.mubr.bf16.mxu0 %v1104
    %1281 = vmatmul.mubr.bf16.gmra.mrb[0].mxu0 %v1103
    %v1282 = vpop.f32.mrb[0].mxu0
    %v1283 = vadd.f32 %v1142, %v1282
    %v1284 = vpop.f32.mrb[0].mxu0
    %v1285 = vpop.f32.mrb[0].mxu0
    %v1286 = vadd.f32 %v1142, %v1285
    %v1287 = vpop.f32.mrb[0].mxu0
    %1288 = vdwg.mxu0
    %v1289 = vadd.f32 %v1275, %v71
    %v1290 = vadd.f32 %v1278, %v72
    %v1291 = vadd.f32 %v1283, %v73
    %v1292 = vadd.f32 %v1286, %v74
    %1293 = vst [vmem:[#allocation7] sm:$0xff] %v1289
    %1294 = vst [vmem:[#allocation7 + $0x8] sm:$0xff] %v1290
    %1295 = vst [vmem:[#allocation7 + $0x10] sm:$0xff] %v1291
    %1296 = vst [vmem:[#allocation7 + $0x18] sm:$0xff] %v1292
    // Predicated region
    $region58: #{tpu_custom_call.1} parent=1 // pred_check
      _
    $region59: #{tpu_custom_call.1} parent=1 // pred_check_branch
      %1298 = sbr.rel (0) target = $region61
    $region60: #{tpu_custom_call.1} parent=1 // pred_region
      %s1300 = ssub.s32 512, 512
      %1301 = vsyncadd [#allocation4], %s1300
      %s1302 = sshll.u32 [#allocation7], 4
      %s1303 = int_to_ptr.vmem [resolvable:$true] %s1302
      %1308 = dma.vmem_to_hbm [thread:$0]  %s1303, 512, %s12, [#allocation4], 128, 128, 8
    $region61: #{tpu_custom_call.1} parent=1 // pred_fallthru
      _
    // Predicated region
    $region62: #{tpu_custom_call.1} parent=1 // pred_check
      _
    $region63: #{tpu_custom_call.1} parent=1 // pred_check_branch
      %1310 = sbr.rel (0) target = $region65
    $region64: #{tpu_custom_call.1} parent=1 // pred_region
      %1311 = dma.done [#allocation4], 512
    $region65: #{tpu_custom_call.1} parent=1 // pred_fallthru
      _
    %1312 = vsyncpa [#allocation3], 1
    %1313 = vsyncpa [#allocation6], 1
    %1314 = vsyncpa [#allocation4], 1

</llo_original>
